<compile_context>
chip_gen: v7x
topology: tpu7x:2x2x1
jax: 0.10.0
libtpu: 0.0.40
codegen_flags: <defaults>
</compile_context>

<pallas_src>
import jax
import jax.numpy as jnp
from jax.experimental import pallas as pl
from jax.experimental.pallas import tpu as pltpu

N_LAYERS = 8  # 4 encoder + 4 decoder Linear layers


def round_up(x, m):
    return (x + m - 1) // m * m


def ae_kernel(x_ref, w_ref, b_ref, o_ref):
    """Fused forward: 8 x (bf16 matmul -> f32 bias add [-> ReLU]) in VMEM.

    x_ref: [tile_b, P] f32   (zero-padded activations)
    w_ref: [8, P, P]   bf16  (zero-padded, pre-transposed to [in, out])
    b_ref: [8, P]      f32   (zero-padded)
    o_ref: [tile_b, P] f32
    ReLU follows every Linear except the last of the encoder (idx 3) and the
    last of the decoder (idx 7), matching the nn.Sequential.
    """
    h = x_ref[...].astype(jnp.float32)
    biases = b_ref[...]  # (8, P) f32, one small load
    for i in range(N_LAYERS):
        w = w_ref[i]  # (P, P) bf16, static slice of the packed buffer
        acc = jnp.dot(h.astype(jnp.bfloat16), w,
                      preferred_element_type=jnp.float32)
        h = acc + biases[i][None, :]
        if (i % 4) != 3:  # no ReLU after encoder[-1] / decoder[-1]
            h = jnp.maximum(h, 0.0)
    o_ref[...] = h.astype(o_ref.dtype)


def make_params(key, input_dim):
    """Deterministic synthetic parameters with the module's shapes.

    Returns a list of (w, b) with w already transposed to [in, out] (f32) and
    b of shape [out] (f32).  Layer widths: D->2D->4D->2D->D, twice.
    """
    dims = [input_dim, 2 * input_dim, 4 * input_dim, 2 * input_dim, input_dim]
    layer_io = []
    for _ in range(2):  # encoder, decoder
        for j in range(4):
            layer_io.append((dims[j], dims[j + 1]))

    params = []
    for fan_in, fan_out in layer_io:
        key, kw, kb = jax.random.split(key, 3)
        bound = 1.0 / (fan_in ** 0.5)  # PyTorch Linear init scale
        w = jax.random.uniform(kw, (fan_in, fan_out), jnp.float32, -bound, bound)
        b = jax.random.uniform(kb, (fan_out,), jnp.float32, -bound, bound)
        params.append((w, b))
    return params


def pack_params(params, p):
    """Zero-pad every layer to [p, p] / [p] and stack into two buffers.

    w_pack: [8, p, p] bf16, b_pack: [8, p] f32.  Zero padding is exact: padded
    weight rows/cols and padded biases contribute nothing to the real lanes,
    and the padded output lanes stay identically zero through all 8 layers.
    """
    n = len(params)
    w_pack = jnp.zeros((n, p, p), jnp.bfloat16)
    b_pack = jnp.zeros((n, p), jnp.float32)
    for i, (w, b) in enumerate(params):
        fi, fo = w.shape
        w_pack = w_pack.at[i, :fi, :fo].set(w.astype(jnp.bfloat16))
        b_pack = b_pack.at[i, :fo].set(b.astype(jnp.float32))
    return w_pack, b_pack


def deep_autoencoder_forward(x, w_pack, b_pack, *, tile_b=128):
    """Run the fused autoencoder forward.  x: [B, D] f32 (unpadded)."""
    B, D = x.shape
    n_layers, P, _ = w_pack.shape
    assert n_layers == N_LAYERS
    assert P % 128 == 0 and tile_b % 8 == 0

    num_tiles = max(1, -(-round_up(B, 8) // tile_b))
    B_pad = round_up(B, 8) if num_tiles == 1 else num_tiles * tile_b

    # Lane-dense, zero-padded activation slab [B_pad, P].
    x_pad = jnp.zeros((B_pad, P), x.dtype).at[:B, :D].set(x)
    out_shape = jax.ShapeDtypeStruct((B_pad, P), x.dtype)

    if num_tiles == 1:
        # Single invocation, no grid: whole problem resident in VMEM, no
        # pipeline prologue/epilogue, no double buffering of the parameters.
        out = pl.pallas_call(ae_kernel, out_shape=out_shape)(
            x_pad, w_pack, b_pack)
    else:
        # Batch-tiled grid; weights/biases keep a constant block index so they
        # stay resident.  "parallel" lets v7x shard tiles across its 2 TCs.
        out = pl.pallas_call(
            ae_kernel,
            out_shape=out_shape,
            grid=(num_tiles,),
            in_specs=[
                pl.BlockSpec((tile_b, P), lambda i: (i, 0)),
                pl.BlockSpec((N_LAYERS, P, P), lambda i: (0, 0, 0)),
                pl.BlockSpec((N_LAYERS, P), lambda i: (0, 0)),
            ],
            out_specs=pl.BlockSpec((tile_b, P), lambda i: (i, 0)),
            compiler_params=pltpu.CompilerParams(
                dimension_semantics=("parallel",)),
        )(x_pad, w_pack, b_pack)

    return out[:B, :D]


def reference_forward(x, params):
    """Plain-JAX reference mirroring the kernel's bf16-weight compute."""
    h = x.astype(jnp.float32)
    for i, (w, b) in enumerate(params):
        h = jnp.dot(h.astype(jnp.bfloat16), w.astype(jnp.bfloat16),
                    preferred_element_type=jnp.float32) + b.astype(jnp.float32)
        if (i % 4) != 3:
            h = jnp.maximum(h, 0.0)
    return h.astype(x.dtype)


if __name__ == "__main__":
    key = jax.random.PRNGKey(0)
    batch, input_dim = 256, 32  # 256 rows -> fills MXU rows, 2 parallel tiles

    kx, kp = jax.random.split(key)
    x = jax.random.normal(kx, (batch, input_dim), jnp.float32)
    params = make_params(kp, input_dim)

    P = round_up(4 * input_dim, 128)  # pad every layer width to 128 lanes
    w_pack, b_pack = pack_params(params, P)

    # Grid path (2 parallel batch tiles of 128 rows).
    out = deep_autoencoder_forward(x, w_pack, b_pack, tile_b=128)
    out = jax.block_until_ready(out)
    ref = reference_forward(x, params)
    assert out.shape == (batch, input_dim)
    assert jnp.allclose(out, ref, atol=1e-3, rtol=1e-3), "mismatch vs reference"

    # Grid-less path (tiny batch fits in a single un-pipelined invocation).
    x_small = x[:8]
    out_small = jax.block_until_ready(
        deep_autoencoder_forward(x_small, w_pack, b_pack, tile_b=128))
    assert out_small.shape == (8, input_dim)
    assert jnp.allclose(out_small, ref[:8], atol=1e-3, rtol=1e-3), \
        "mismatch vs reference (small batch)"

    print("KERNEL_OK")
</pallas_src>

<mosaic_0001>
module attributes {stable_mosaic.version = 11 : i64} {
  func.func @ae_kernel(%arg0: i32, %arg1: memref<128x128xf32, #tpu.memory_space<vmem>>, %arg2: memref<8x128x128xbf16, #tpu.memory_space<vmem>>, %arg3: memref<8x128xf32, #tpu.memory_space<vmem>>, %arg4: memref<128x128xf32, #tpu.memory_space<vmem>>) attributes {dimension_semantics = [#tpu.dimension_semantics<parallel>], iteration_bounds = array<i64: 2>, scalar_prefetch = 0 : i64, scratch_operands = 0 : i64, tpu.core_type = #tpu.core_type<tc>, window_params = [{transform_indices = @transform_0, window_bounds = array<i64: 128, 128>}, {pipeline_mode = #tpu.pipeline_mode<synchronous>, transform_indices = @transform_1, window_bounds = array<i64: 8, 128, 128>}, {pipeline_mode = #tpu.pipeline_mode<synchronous>, transform_indices = @transform_2, window_bounds = array<i64: 8, 128>}, {transform_indices = @transform_3, window_bounds = array<i64: 128, 128>}]} {
    %c0 = arith.constant 0 : index
    %c0_0 = arith.constant 0 : index
    %0 = vector.load %arg1[%c0, %c0_0] : memref<128x128xf32, #tpu.memory_space<vmem>>, vector<128x128xf32>
    %c0_1 = arith.constant 0 : index
    %c0_2 = arith.constant 0 : index
    %1 = vector.load %arg3[%c0_1, %c0_2] : memref<8x128xf32, #tpu.memory_space<vmem>>, vector<8x128xf32>
    %c0_3 = arith.constant 0 : index
    %c0_4 = arith.constant 0 : index
    %c0_5 = arith.constant 0 : index
    %2 = vector.load %arg2[%c0_3, %c0_4, %c0_5] : memref<8x128x128xbf16, #tpu.memory_space<vmem>>, vector<1x128x128xbf16>
    %3 = vector.shape_cast %2 : vector<1x128x128xbf16> to vector<128x128xbf16>
    %4 = arith.truncf %0 : vector<128x128xf32> to vector<128x128xbf16>
    %cst = arith.constant dense<0.000000e+00> : vector<128x128xf32>
    %5 = tpu.matmul %4, %3, %cst {dimension_numbers = #tpu.dot_dimension_numbers<[1], [0], [0], [1], [0, 0, 1, 1], [], []>} : vector<128x128xbf16>, vector<128x128xbf16>, vector<128x128xf32> -> vector<128x128xf32>
    %6 = vector.extract_strided_slice %1 {offsets = [0, 0], sizes = [1, 128], strides = [1, 1]} : vector<8x128xf32> to vector<1x128xf32>
    %7 = vector.shape_cast %6 : vector<1x128xf32> to vector<128xf32>
    %8 = vector.shape_cast %7 : vector<128xf32> to vector<1x128xf32>
    %9 = vector.broadcast %8 : vector<1x128xf32> to vector<128x128xf32>
    %10 = arith.addf %5, %9 : vector<128x128xf32>
    %cst_6 = arith.constant 0.000000e+00 : f32
    %11 = vector.broadcast %cst_6 : f32 to vector<128x128xf32>
    %12 = arith.maximumf %10, %11 : vector<128x128xf32>
    %c1 = arith.constant 1 : index
    %c0_7 = arith.constant 0 : index
    %c0_8 = arith.constant 0 : index
    %13 = vector.load %arg2[%c1, %c0_7, %c0_8] : memref<8x128x128xbf16, #tpu.memory_space<vmem>>, vector<1x128x128xbf16>
    %14 = vector.shape_cast %13 : vector<1x128x128xbf16> to vector<128x128xbf16>
    %15 = arith.truncf %12 : vector<128x128xf32> to vector<128x128xbf16>
    %cst_9 = arith.constant dense<0.000000e+00> : vector<128x128xf32>
    %16 = tpu.matmul %15, %14, %cst_9 {dimension_numbers = #tpu.dot_dimension_numbers<[1], [0], [0], [1], [0, 0, 1, 1], [], []>} : vector<128x128xbf16>, vector<128x128xbf16>, vector<128x128xf32> -> vector<128x128xf32>
    %17 = vector.extract_strided_slice %1 {offsets = [1, 0], sizes = [1, 128], strides = [1, 1]} : vector<8x128xf32> to vector<1x128xf32>
    %18 = vector.shape_cast %17 : vector<1x128xf32> to vector<128xf32>
    %19 = vector.shape_cast %18 : vector<128xf32> to vector<1x128xf32>
    %20 = vector.broadcast %19 : vector<1x128xf32> to vector<128x128xf32>
    %21 = arith.addf %16, %20 : vector<128x128xf32>
    %cst_10 = arith.constant 0.000000e+00 : f32
    %22 = vector.broadcast %cst_10 : f32 to vector<128x128xf32>
    %23 = arith.maximumf %21, %22 : vector<128x128xf32>
    %c2 = arith.constant 2 : index
    %c0_11 = arith.constant 0 : index
    %c0_12 = arith.constant 0 : index
    %24 = vector.load %arg2[%c2, %c0_11, %c0_12] : memref<8x128x128xbf16, #tpu.memory_space<vmem>>, vector<1x128x128xbf16>
    %25 = vector.shape_cast %24 : vector<1x128x128xbf16> to vector<128x128xbf16>
    %26 = arith.truncf %23 : vector<128x128xf32> to vector<128x128xbf16>
    %cst_13 = arith.constant dense<0.000000e+00> : vector<128x128xf32>
    %27 = tpu.matmul %26, %25, %cst_13 {dimension_numbers = #tpu.dot_dimension_numbers<[1], [0], [0], [1], [0, 0, 1, 1], [], []>} : vector<128x128xbf16>, vector<128x128xbf16>, vector<128x128xf32> -> vector<128x128xf32>
    %28 = vector.extract_strided_slice %1 {offsets = [2, 0], sizes = [1, 128], strides = [1, 1]} : vector<8x128xf32> to vector<1x128xf32>
    %29 = vector.shape_cast %28 : vector<1x128xf32> to vector<128xf32>
    %30 = vector.shape_cast %29 : vector<128xf32> to vector<1x128xf32>
    %31 = vector.broadcast %30 : vector<1x128xf32> to vector<128x128xf32>
    %32 = arith.addf %27, %31 : vector<128x128xf32>
    %cst_14 = arith.constant 0.000000e+00 : f32
    %33 = vector.broadcast %cst_14 : f32 to vector<128x128xf32>
    %34 = arith.maximumf %32, %33 : vector<128x128xf32>
    %c3 = arith.constant 3 : index
    %c0_15 = arith.constant 0 : index
    %c0_16 = arith.constant 0 : index
    %35 = vector.load %arg2[%c3, %c0_15, %c0_16] : memref<8x128x128xbf16, #tpu.memory_space<vmem>>, vector<1x128x128xbf16>
    %36 = vector.shape_cast %35 : vector<1x128x128xbf16> to vector<128x128xbf16>
    %37 = arith.truncf %34 : vector<128x128xf32> to vector<128x128xbf16>
    %cst_17 = arith.constant dense<0.000000e+00> : vector<128x128xf32>
    %38 = tpu.matmul %37, %36, %cst_17 {dimension_numbers = #tpu.dot_dimension_numbers<[1], [0], [0], [1], [0, 0, 1, 1], [], []>} : vector<128x128xbf16>, vector<128x128xbf16>, vector<128x128xf32> -> vector<128x128xf32>
    %39 = vector.extract_strided_slice %1 {offsets = [3, 0], sizes = [1, 128], strides = [1, 1]} : vector<8x128xf32> to vector<1x128xf32>
    %40 = vector.shape_cast %39 : vector<1x128xf32> to vector<128xf32>
    %41 = vector.shape_cast %40 : vector<128xf32> to vector<1x128xf32>
    %42 = vector.broadcast %41 : vector<1x128xf32> to vector<128x128xf32>
    %43 = arith.addf %38, %42 : vector<128x128xf32>
    %c4 = arith.constant 4 : index
    %c0_18 = arith.constant 0 : index
    %c0_19 = arith.constant 0 : index
    %44 = vector.load %arg2[%c4, %c0_18, %c0_19] : memref<8x128x128xbf16, #tpu.memory_space<vmem>>, vector<1x128x128xbf16>
    %45 = vector.shape_cast %44 : vector<1x128x128xbf16> to vector<128x128xbf16>
    %46 = arith.truncf %43 : vector<128x128xf32> to vector<128x128xbf16>
    %cst_20 = arith.constant dense<0.000000e+00> : vector<128x128xf32>
    %47 = tpu.matmul %46, %45, %cst_20 {dimension_numbers = #tpu.dot_dimension_numbers<[1], [0], [0], [1], [0, 0, 1, 1], [], []>} : vector<128x128xbf16>, vector<128x128xbf16>, vector<128x128xf32> -> vector<128x128xf32>
    %48 = vector.extract_strided_slice %1 {offsets = [4, 0], sizes = [1, 128], strides = [1, 1]} : vector<8x128xf32> to vector<1x128xf32>
    %49 = vector.shape_cast %48 : vector<1x128xf32> to vector<128xf32>
    %50 = vector.shape_cast %49 : vector<128xf32> to vector<1x128xf32>
    %51 = vector.broadcast %50 : vector<1x128xf32> to vector<128x128xf32>
    %52 = arith.addf %47, %51 : vector<128x128xf32>
    %cst_21 = arith.constant 0.000000e+00 : f32
    %53 = vector.broadcast %cst_21 : f32 to vector<128x128xf32>
    %54 = arith.maximumf %52, %53 : vector<128x128xf32>
    %c5 = arith.constant 5 : index
    %c0_22 = arith.constant 0 : index
    %c0_23 = arith.constant 0 : index
    %55 = vector.load %arg2[%c5, %c0_22, %c0_23] : memref<8x128x128xbf16, #tpu.memory_space<vmem>>, vector<1x128x128xbf16>
    %56 = vector.shape_cast %55 : vector<1x128x128xbf16> to vector<128x128xbf16>
    %57 = arith.truncf %54 : vector<128x128xf32> to vector<128x128xbf16>
    %cst_24 = arith.constant dense<0.000000e+00> : vector<128x128xf32>
    %58 = tpu.matmul %57, %56, %cst_24 {dimension_numbers = #tpu.dot_dimension_numbers<[1], [0], [0], [1], [0, 0, 1, 1], [], []>} : vector<128x128xbf16>, vector<128x128xbf16>, vector<128x128xf32> -> vector<128x128xf32>
    %59 = vector.extract_strided_slice %1 {offsets = [5, 0], sizes = [1, 128], strides = [1, 1]} : vector<8x128xf32> to vector<1x128xf32>
    %60 = vector.shape_cast %59 : vector<1x128xf32> to vector<128xf32>
    %61 = vector.shape_cast %60 : vector<128xf32> to vector<1x128xf32>
    %62 = vector.broadcast %61 : vector<1x128xf32> to vector<128x128xf32>
    %63 = arith.addf %58, %62 : vector<128x128xf32>
    %cst_25 = arith.constant 0.000000e+00 : f32
    %64 = vector.broadcast %cst_25 : f32 to vector<128x128xf32>
    %65 = arith.maximumf %63, %64 : vector<128x128xf32>
    %c6 = arith.constant 6 : index
    %c0_26 = arith.constant 0 : index
    %c0_27 = arith.constant 0 : index
    %66 = vector.load %arg2[%c6, %c0_26, %c0_27] : memref<8x128x128xbf16, #tpu.memory_space<vmem>>, vector<1x128x128xbf16>
    %67 = vector.shape_cast %66 : vector<1x128x128xbf16> to vector<128x128xbf16>
    %68 = arith.truncf %65 : vector<128x128xf32> to vector<128x128xbf16>
    %cst_28 = arith.constant dense<0.000000e+00> : vector<128x128xf32>
    %69 = tpu.matmul %68, %67, %cst_28 {dimension_numbers = #tpu.dot_dimension_numbers<[1], [0], [0], [1], [0, 0, 1, 1], [], []>} : vector<128x128xbf16>, vector<128x128xbf16>, vector<128x128xf32> -> vector<128x128xf32>
    %70 = vector.extract_strided_slice %1 {offsets = [6, 0], sizes = [1, 128], strides = [1, 1]} : vector<8x128xf32> to vector<1x128xf32>
    %71 = vector.shape_cast %70 : vector<1x128xf32> to vector<128xf32>
    %72 = vector.shape_cast %71 : vector<128xf32> to vector<1x128xf32>
    %73 = vector.broadcast %72 : vector<1x128xf32> to vector<128x128xf32>
    %74 = arith.addf %69, %73 : vector<128x128xf32>
    %cst_29 = arith.constant 0.000000e+00 : f32
    %75 = vector.broadcast %cst_29 : f32 to vector<128x128xf32>
    %76 = arith.maximumf %74, %75 : vector<128x128xf32>
    %c7 = arith.constant 7 : index
    %c0_30 = arith.constant 0 : index
    %c0_31 = arith.constant 0 : index
    %77 = vector.load %arg2[%c7, %c0_30, %c0_31] : memref<8x128x128xbf16, #tpu.memory_space<vmem>>, vector<1x128x128xbf16>
    %78 = vector.shape_cast %77 : vector<1x128x128xbf16> to vector<128x128xbf16>
    %79 = arith.truncf %76 : vector<128x128xf32> to vector<128x128xbf16>
    %cst_32 = arith.constant dense<0.000000e+00> : vector<128x128xf32>
    %80 = tpu.matmul %79, %78, %cst_32 {dimension_numbers = #tpu.dot_dimension_numbers<[1], [0], [0], [1], [0, 0, 1, 1], [], []>} : vector<128x128xbf16>, vector<128x128xbf16>, vector<128x128xf32> -> vector<128x128xf32>
    %81 = vector.extract_strided_slice %1 {offsets = [7, 0], sizes = [1, 128], strides = [1, 1]} : vector<8x128xf32> to vector<1x128xf32>
    %82 = vector.shape_cast %81 : vector<1x128xf32> to vector<128xf32>
    %83 = vector.shape_cast %82 : vector<128xf32> to vector<1x128xf32>
    %84 = vector.broadcast %83 : vector<1x128xf32> to vector<128x128xf32>
    %85 = arith.addf %80, %84 : vector<128x128xf32>
    %c0_33 = arith.constant 0 : index
    %c0_34 = arith.constant 0 : index
    %86 = vector.load %arg4[%c0_33, %c0_34] : memref<128x128xf32, #tpu.memory_space<vmem>>, vector<128x128xf32>
    tpu.vector_store %arg4[%c0_33, %c0_34], %85 {strides = array<i32>} : memref<128x128xf32, #tpu.memory_space<vmem>>, vector<128x128xf32>,
    return
  }
  func.func @transform_0(%arg0: i32) -> (i32, i32) {
    %c0_i32 = arith.constant 0 : i32
    %c0_i32_0 = arith.constant 0 : i32
    return %arg0, %c0_i32 : i32, i32
  }
  func.func @transform_1(%arg0: i32) -> (i32, i32, i32) {
    %c0_i32 = arith.constant 0 : i32
    %c0_i32_0 = arith.constant 0 : i32
    %c0_i32_1 = arith.constant 0 : i32
    %c0_i32_2 = arith.constant 0 : i32
    return %c0_i32, %c0_i32_0, %c0_i32_1 : i32, i32, i32
  }
  func.func @transform_2(%arg0: i32) -> (i32, i32) {
    %c0_i32 = arith.constant 0 : i32
    %c0_i32_0 = arith.constant 0 : i32
    %c0_i32_1 = arith.constant 0 : i32
    return %c0_i32, %c0_i32_0 : i32, i32
  }
  func.func @transform_3(%arg0: i32) -> (i32, i32) {
    %c0_i32 = arith.constant 0 : i32
    %c0_i32_0 = arith.constant 0 : i32
    return %arg0, %c0_i32 : i32, i32
  }
}

</mosaic_0001>

<llo_original>
// kernel: tpu_custom_call.1
$region0: #{tpu_custom_call.1}
  #allocation0 [shape = 'u32[]', space=smem, size = 0x4, offset = 0x4, fixed_abs, tag = 'smem constant byte address 0x4 - core index']
  #allocation1 [shape = 'u32[144,128]{1,0:T(1,128)}', space=vmem, size = 0x12000, scoped, tag = 'internal scratch']
  %s0 = inlined_call_operand.hbm [shape: f32[256,128], index: 0, kind: input, shape index: {}]
  %s1 = inlined_call_operand.hbm [shape: bf16[8,128,128], index: 1, kind: input, shape index: {}]
  %s2 = inlined_call_operand.hbm [shape: f32[8,128], index: 2, kind: input, shape index: {}]
  %s3 = inlined_call_operand.hbm [shape: f32[256,128], index: 3, kind: output, shape index: {}]
  %s4 = sld [smem:[#allocation0]]
  $region57: #{tpu_custom_call.1} parent=0
    _
  %s6 = ssub.s32 1, %s4
  %s7 = scalar_select 0, %s6, %s4
  $region1: #{tpu_custom_call.1} parent=0
    #allocation2 [shape = 'u8[131072]{0}', space=vmem, size = 0x20000, scoped, tag = 'input window, operand 0']
    #allocation3 [shape = 's32[2]{0}', space=sflag, size = 0x8, scoped, tag = 'scoped memory for tpu_custom_call.1']
    #allocation4 [shape = 's32[2]{0}', space=sflag, size = 0x8, scoped, tag = 'scoped memory for tpu_custom_call.1']
    #allocation5 [shape = 'u8[262144]{0}', space=vmem, size = 0x40000, scoped, tag = 'input window, operand 1, single buffered']
    #allocation6 [shape = 's32[1]{0}', space=sflag, size = 0x4, scoped, tag = 'scoped memory for tpu_custom_call.1']
    #allocation7 [shape = 'u8[4096]{0}', space=vmem, size = 0x1000, scoped, tag = 'input window, operand 2, single buffered']
    #allocation8 [shape = 'u8[131072]{0}', space=vmem, size = 0x20000, scoped, tag = 'output window, operand 0']
    %8 = vsyncpa [#allocation3], 0
    %s9 = scalar_lea.sflag [#allocation3], 1
    %10 = vsyncpa %s9, 0
    %11 = vsyncpa [#allocation6], 0
    %12 = vsyncpa [#allocation4], 0
    %s13 = scalar_lea.sflag [#allocation4], 1
    %14 = vsyncpa %s13, 0
    loop: start=0, step=1, limit=4
    $region2: #{tpu_custom_call.1} parent=1 // loop_pre_header
      _
    $region3: #{tpu_custom_call.1} parent=1 // loop_header
      %s16 = sphi 0, %s20
      %p17 = scmp.ge.s32.totalorder %s16, 4
      %s26 = sphi 0, %s28
      %s29 = sphi 0, %s26
      %s30 = sphi 0, %s29
      %s46 = sphi 0, %s30
      %s50 = sphi 0, %s50
      %s52 = sphi 0, %s50
      %s53 = sphi 0, %s52
      %s67 = sphi 0, %s53
      %s71 = sphi 0, %s71
      %s73 = sphi 0, %s71
      %s74 = sphi 0, %s73
      %s88 = sphi 0, %s74
      %s94 = sphi 0, %s96
      %s97 = sphi 0, %s94
      %s98 = sphi 0, %s97
      %s114 = sphi 0, %s98
    $region4: #{tpu_custom_call.1} parent=1 // loop_header_branch
      %19 = sbr.rel (%p17) target = $region8
    $region5: #{tpu_custom_call.1} parent=1 // loop_body
      %s21 = ssub.s32 %s16, 1
      %s22 = ssub.s32 %s16, 2
      %s23 = sadd.s32 %s16, 1
      %s24 = ssub.s32 %s16, %s23
      %p25 = scmp.eq.s32.totalorder %s24, 0
      %s27 = sadd.s32 %s26, 1
      %s28 = scalar_select %p25, %s26, %s27
      %p31 = pneg %p25
      %p32 = scmp.eq.s32.totalorder %s16, 1
      %p33 = por %p31, %p32
      %p34 = scmp.ne.s32.totalorder %s26, %s29
      %p35 = scmp.eq.s32.totalorder %s16, 0
      %p36 = por %p34, %p35
      %p37 = scmp.ne.s32.totalorder %s26, %s29
      %p38 = scmp.eq.s32.totalorder %s21, 1
      %p39 = por %p37, %p38
      %p40 = scmp.ne.s32.totalorder %s29, %s30
      %p41 = scmp.eq.s32.totalorder %s21, 0
      %p42 = por %p40, %p41
      %p43 = scmp.ne.s32.totalorder %s29, %s30
      %p44 = scmp.eq.s32.totalorder %s22, 1
      %p45 = por %p43, %p44
      %p47 = scmp.ne.s32.totalorder %s30, %s46
      %p48 = scmp.eq.s32.totalorder %s22, 0
      %p49 = por %p47, %p48
      %s51 = sadd.s32 %s50, 1
      %p54 = scmp.eq.s32.totalorder %s16, 1
      %p55 = scmp.ne.s32.totalorder %s50, %s52
      %p56 = scmp.eq.s32.totalorder %s16, 0
      %p57 = por %p55, %p56
      %p58 = scmp.ne.s32.totalorder %s50, %s52
      %p59 = scmp.eq.s32.totalorder %s21, 1
      %p60 = por %p58, %p59
      %p61 = scmp.ne.s32.totalorder %s52, %s53
      %p62 = scmp.eq.s32.totalorder %s21, 0
      %p63 = por %p61, %p62
      %p64 = scmp.ne.s32.totalorder %s52, %s53
      %p65 = scmp.eq.s32.totalorder %s22, 1
      %p66 = por %p64, %p65
      %p68 = scmp.ne.s32.totalorder %s53, %s67
      %p69 = scmp.eq.s32.totalorder %s22, 0
      %p70 = por %p68, %p69
      %s72 = sadd.s32 %s71, 1
      %p75 = scmp.eq.s32.totalorder %s16, 1
      %p76 = scmp.ne.s32.totalorder %s71, %s73
      %p77 = scmp.eq.s32.totalorder %s16, 0
      %p78 = por %p76, %p77
      %p79 = scmp.ne.s32.totalorder %s71, %s73
      %p80 = scmp.eq.s32.totalorder %s21, 1
      %p81 = por %p79, %p80
      %p82 = scmp.ne.s32.totalorder %s73, %s74
      %p83 = scmp.eq.s32.totalorder %s21, 0
      %p84 = por %p82, %p83
      %p85 = scmp.ne.s32.totalorder %s73, %s74
      %p86 = scmp.eq.s32.totalorder %s22, 1
      %p87 = por %p85, %p86
      %p89 = scmp.ne.s32.totalorder %s74, %s88
      %p90 = scmp.eq.s32.totalorder %s22, 0
      %p91 = por %p89, %p90
      %s92 = ssub.s32 %s16, %s23
      %p93 = scmp.eq.s32.totalorder %s92, 0
      %s95 = sadd.s32 %s94, 1
      %s96 = scalar_select %p93, %s94, %s95
      %p99 = pneg %p93
      %p100 = scmp.eq.s32.totalorder %s16, 1
      %p101 = por %p99, %p100
      %p102 = scmp.ne.s32.totalorder %s94, %s97
      %p103 = scmp.eq.s32.totalorder %s16, 0
      %p104 = por %p102, %p103
      %p105 = scmp.ne.s32.totalorder %s94, %s97
      %p106 = scmp.eq.s32.totalorder %s21, 1
      %p107 = por %p105, %p106
      %p108 = scmp.ne.s32.totalorder %s97, %s98
      %p109 = scmp.eq.s32.totalorder %s21, 0
      %p110 = por %p108, %p109
      %p111 = scmp.ne.s32.totalorder %s97, %s98
      %p112 = scmp.eq.s32.totalorder %s22, 1
      %p113 = por %p111, %p112
      %p115 = scmp.ne.s32.totalorder %s98, %s114
      %p116 = scmp.eq.s32.totalorder %s22, 0
      %p117 = por %p115, %p116
      %p118 = scmp.le.s32.totalorder 1, %s16
      %p119 = scmp.lt.s32.totalorder %s16, 3
      %p120 = pnand %p118, %p119
      %p121 = pneg %p120
      // Predicated region
      $region9: #{tpu_custom_call.1} parent=5 // pred_check
        _
      $region10: #{tpu_custom_call.1} parent=5 // pred_check_branch
        %123 = sbr.rel (%p120) target = $region12
      $region11: #{tpu_custom_call.1} parent=5 // pred_region
        %s124 = ssub.s32 %s16, 1
        // Predicated region
        $region13: #{tpu_custom_call.1} parent=11 // pred_check
          %p125 = pneg %p63
        $region14: #{tpu_custom_call.1} parent=11 // pred_check_branch
          %127 = sbr.rel (%p125) target = $region16
        $region15: #{tpu_custom_call.1} parent=11 // pred_region
          %s129 = ssub.s32 8192, 8192
          %130 = vsyncadd [#allocation6], %s129
          %s131 = sshll.u32 [#allocation5], 4
          %s132 = int_to_ptr.vmem [resolvable:$true] %s131
          %137 = dma.hbm_to_vmem [thread:$0]  %s1, 8192, %s132, [#allocation6], 64, 64, 4
        $region16: #{tpu_custom_call.1} parent=11 // pred_fallthru
          _
        // Predicated region
        $region17: #{tpu_custom_call.1} parent=11 // pred_check
          %p138 = pneg %p84
        $region18: #{tpu_custom_call.1} parent=11 // pred_check_branch
          %140 = sbr.rel (%p138) target = $region20
        $region19: #{tpu_custom_call.1} parent=11 // pred_region
          %s142 = ssub.s32 128, 128
          %143 = vsyncadd [#allocation6], %s142
          %s145 = sshll.u32 [#allocation7], 4
          %s146 = int_to_ptr.vmem [resolvable:$true] %s145
          %148 = dma.hbm_to_vmem [thread:$0]  %s2, 128, %s146, [#allocation6]
        $region20: #{tpu_custom_call.1} parent=11 // pred_fallthru
          _
      $region12: #{tpu_custom_call.1} parent=5 // pred_fallthru
        _
      %p149 = scmp.lt.s32.totalorder %s16, 2
      // Predicated region
      $region21: #{tpu_custom_call.1} parent=5 // pred_check
        %p150 = pneg %p149
      $region22: #{tpu_custom_call.1} parent=5 // pred_check_branch
        %152 = sbr.rel (%p150) target = $region24
      $region23: #{tpu_custom_call.1} parent=5 // pred_region
        // Predicated region
        $region25: #{tpu_custom_call.1} parent=23 // pred_check
          %p153 = pneg %p36
        $region26: #{tpu_custom_call.1} parent=23 // pred_check_branch
          %155 = sbr.rel (%p153) target = $region28
        $region27: #{tpu_custom_call.1} parent=23 // pred_region
          %s156 = sand.u32 %s26, 1
          %s157 = scalar_lea.sflag [#allocation3], %s156
          %s158 = sand.u32 %s26, 1
          %s159 = smul.addr %s158, 128
          %s160 = scalar_lea.vmem [#allocation2], %s159
          %s161 = smul.u32 16, %s16
          %s163 = ssub.s32 2048, 2048
          %164 = vsyncadd %s157, %s163
          %s165 = smul.addr %s161, 128
          %s166 = scalar_lea.hbm %s0, %s165
          %s167 = sshll.u32 %s160, 4
          %s168 = int_to_ptr.vmem [resolvable:$true] %s167
          %173 = dma.hbm_to_vmem [thread:$0]  %s166, 2048, %s168, %s157, 128, 128, 8
        $region28: #{tpu_custom_call.1} parent=23 // pred_fallthru
          _
      $region24: #{tpu_custom_call.1} parent=5 // pred_fallthru
        _
      %p174 = scmp.le.s32.totalorder 1, %s16
      %p175 = scmp.lt.s32.totalorder %s16, 3
      %p176 = pnand %p174, %p175
      %p177 = pneg %p176
      // Predicated region
      $region29: #{tpu_custom_call.1} parent=5 // pred_check
        _
      $region30: #{tpu_custom_call.1} parent=5 // pred_check_branch
        %179 = sbr.rel (%p176) target = $region32
      $region31: #{tpu_custom_call.1} parent=5 // pred_region
        %s180 = ssub.s32 %s16, 1
        %s181 = sand.u32 %s29, 1
        %s182 = scalar_lea.sflag [#allocation3], %s181
        %s183 = sand.u32 %s29, 1
        %s184 = smul.addr %s183, 128
        %s185 = scalar_lea.vmem [#allocation2], %s184
        // Predicated region
        $region33: #{tpu_custom_call.1} parent=31 // pred_check
          %p186 = pneg %p42
        $region34: #{tpu_custom_call.1} parent=31 // pred_check_branch
          %188 = sbr.rel (%p186) target = $region36
        $region35: #{tpu_custom_call.1} parent=31 // pred_region
          %189 = dma.done %s182, 2048
        $region36: #{tpu_custom_call.1} parent=31 // pred_fallthru
          _
        // Predicated region
        $region37: #{tpu_custom_call.1} parent=31 // pred_check
          %p190 = pneg %p63
        $region38: #{tpu_custom_call.1} parent=31 // pred_check_branch
          %192 = sbr.rel (%p190) target = $region40
        $region39: #{tpu_custom_call.1} parent=31 // pred_region
          %193 = dma.done [#allocation6], 8192
        $region40: #{tpu_custom_call.1} parent=31 // pred_fallthru
          _
        // Predicated region
        $region41: #{tpu_custom_call.1} parent=31 // pred_check
          %p194 = pneg %p84
        $region42: #{tpu_custom_call.1} parent=31 // pred_check_branch
          %196 = sbr.rel (%p194) target = $region44
        $region43: #{tpu_custom_call.1} parent=31 // pred_region
          %197 = dma.done [#allocation6], 128
        $region44: #{tpu_custom_call.1} parent=31 // pred_fallthru
          _
        %s198 = sand.u32 %s29, 1
        %s199 = scalar_lea.sflag [#allocation3], %s198
        %s200 = sand.u32 %s29, 1
        %s201 = smul.addr %s200, 128
        %s202 = scalar_lea.vmem [#allocation2], %s201
        %p203 = pneg %p42
        %p204 = pneg %p39
        %p205 = pneg %p63
        %p206 = pneg %p60
        %p207 = pneg %p84
        %p208 = pneg %p81
        %p209 = pneg %p110
        %p210 = pneg %p107
        %s211 = sand.u32 %s97, 1
        %s212 = scalar_lea.sflag [#allocation4], %s211
        %s213 = sand.u32 %s97, 1
        %s214 = smul.addr %s213, 128
        %s215 = scalar_lea.vmem [#allocation8], %s214
        %s216 = smul.u32 16, %s21
        %s217 = smul.u32 16, %s21
        %v219 = vld [vmem:[%s185] sm:$0xff]
        %v220 = vld [vmem:[%s185 + $0x8] sm:$0xff]
        %v221 = vld [vmem:[%s185 + $0x10] sm:$0xff]
        %v222 = vld [vmem:[%s185 + $0x18] sm:$0xff]
        %v223 = vld [vmem:[%s185 + $0x20] sm:$0xff]
        %v224 = vld [vmem:[%s185 + $0x28] sm:$0xff]
        %v225 = vld [vmem:[%s185 + $0x30] sm:$0xff]
        %v226 = vld [vmem:[%s185 + $0x38] sm:$0xff]
        %v227 = vld [vmem:[%s185 + $0x40] sm:$0xff]
        %v228 = vld [vmem:[%s185 + $0x48] sm:$0xff]
        %v229 = vld [vmem:[%s185 + $0x50] sm:$0xff]
        %v230 = vld [vmem:[%s185 + $0x58] sm:$0xff]
        %v231 = vld [vmem:[%s185 + $0x60] sm:$0xff]
        %v232 = vld [vmem:[%s185 + $0x68] sm:$0xff]
        %v233 = vld [vmem:[%s185 + $0x70] sm:$0xff]
        %v234 = vld [vmem:[%s185 + $0x78] sm:$0xff]
        %v235 = vld [vmem:[#allocation7] sm:$0xff]
        %v236 = vld [vmem:[#allocation5] sm:$0xf]
        %v237 = vld [vmem:[#allocation5 + $0x4] sm:$0xf]
        %v238 = vld [vmem:[#allocation5 + $0x8] sm:$0xf]
        %v239 = vld [vmem:[#allocation5 + $0xc] sm:$0xf]
        %v240 = vld [vmem:[#allocation5 + $0x10] sm:$0xf]
        %v241 = vld [vmem:[#allocation5 + $0x14] sm:$0xf]
        %v242 = vld [vmem:[#allocation5 + $0x18] sm:$0xf]
        %v243 = vld [vmem:[#allocation5 + $0x1c] sm:$0xf]
        %v244 = vld [vmem:[#allocation5 + $0x20] sm:$0xf]
        %v245 = vld [vmem:[#allocation5 + $0x24] sm:$0xf]
        %v246 = vld [vmem:[#allocation5 + $0x28] sm:$0xf]
        %v247 = vld [vmem:[#allocation5 + $0x2c] sm:$0xf]
        %v248 = vld [vmem:[#allocation5 + $0x30] sm:$0xf]
        %v249 = vld [vmem:[#allocation5 + $0x34] sm:$0xf]
        %v250 = vld [vmem:[#allocation5 + $0x38] sm:$0xf]
        %v251 = vld [vmem:[#allocation5 + $0x3c] sm:$0xf]
        %v252 = vpack.c.bf16 %v220, %v219
        %v253 = vpack.c.bf16 %v222, %v221
        %v254 = vpack.c.bf16 %v224, %v223
        %v255 = vpack.c.bf16 %v226, %v225
        %v256 = vpack.c.bf16 %v228, %v227
        %v257 = vpack.c.bf16 %v230, %v229
        %v258 = vpack.c.bf16 %v232, %v231
        %v259 = vpack.c.bf16 %v234, %v233
        %v260 = vlaneseq
        %v261 = vshrl.u32 %v260, 7
        %v262 = vsub.s32 0, %v261
        %v263 = vrot.slane %v235, %v262
        %v280 = vunpack.c.l.b16 %v236
        %v281 = vunpack.c.l.b16 %v237
        %v282 = vunpack.c.l.b16 %v238
        %v283 = vunpack.c.l.b16 %v239
        %v284 = vunpack.c.l.b16 %v240
        %v285 = vunpack.c.l.b16 %v241
        %v286 = vunpack.c.l.b16 %v242
        %v287 = vunpack.c.l.b16 %v243
        %v288 = vunpack.c.l.b16 %v244
        %v289 = vunpack.c.l.b16 %v245
        %v290 = vunpack.c.l.b16 %v246
        %v291 = vunpack.c.l.b16 %v247
        %v292 = vunpack.c.l.b16 %v248
        %v293 = vunpack.c.l.b16 %v249
        %v294 = vunpack.c.l.b16 %v250
        %v295 = vunpack.c.l.b16 %v251
        %v296 = vpack.c.b16 %v281, %v280
        %v297 = vpack.c.b16 %v283, %v282
        %v298 = vpack.c.b16 %v285, %v284
        %v299 = vpack.c.b16 %v287, %v286
        %v300 = vpack.c.b16 %v289, %v288
        %v301 = vpack.c.b16 %v291, %v290
        %v302 = vpack.c.b16 %v293, %v292
        %v303 = vpack.c.b16 %v295, %v294
        %312 = vmatprep.subr.bf16.mxu0 0
        %313 = vmatpush1.bf16.msra.mxu0 %v296
        %314 = vmatprep.subr.bf16.mxu0 0
        %315 = vmatpush1.bf16.msra.mxu0 %v297
        %316 = vmatprep.subr.bf16.mxu0 0
        %317 = vmatpush1.bf16.msra.mxu0 %v298
        %318 = vmatprep.subr.bf16.mxu0 0
        %319 = vmatpush1.bf16.msra.mxu0 %v299
        %320 = vmatprep.subr.bf16.mxu0 0
        %321 = vmatpush1.bf16.msra.mxu0 %v300
        %322 = vmatprep.subr.bf16.mxu0 0
        %323 = vmatpush1.bf16.msra.mxu0 %v301
        %324 = vmatprep.subr.bf16.mxu0 0
        %325 = vmatpush1.bf16.msra.mxu0 %v302
        %326 = vmatprep.subr.bf16.mxu0 0
        %327 = vmatpush1.bf16.msra.mxu0 %v303
        %328 = vmatprep.subr.bf16.mxu0 0
        %329 = vmatpush1.bf16.msra.mxu0 0
        %330 = vmatprep.subr.bf16.mxu0 0
        %331 = vmatpush1.bf16.msra.mxu0 0
        %332 = vmatprep.subr.bf16.mxu0 0
        %333 = vmatpush1.bf16.msra.mxu0 0
        %334 = vmatprep.subr.bf16.mxu0 0
        %335 = vmatpush1.bf16.msra.mxu0 0
        %336 = vmatprep.subr.bf16.mxu0 0
        %337 = vmatpush1.bf16.msra.mxu0 0
        %338 = vmatprep.subr.bf16.mxu0 0
        %339 = vmatpush1.bf16.msra.mxu0 0
        %340 = vmatprep.subr.bf16.mxu0 0
        %341 = vmatpush1.bf16.msra.mxu0 0
        %342 = vmatprep.subr.bf16.mxu0 0
        %343 = vmatpush1.bf16.msra.mxu0 0
        %344 = vmatprep.mubr.bf16.mxu0 0
        %345 = vmatmul.mubr.bf16.gmra.mrb[0].mxu0 %v252
        %v346 = vpop.f32.mrb[0].mxu0
        %v347 = vadd.f32 %v263, %v346
        %v348 = vpop.f32.mrb[0].mxu0
        %v349 = vpop.f32.mrb[0].mxu0
        %v350 = vadd.f32 %v263, %v349
        %v351 = vpop.f32.mrb[0].mxu0
        %352 = vmatprep.mubr.bf16.mxu0 0
        %353 = vmatmul.mubr.bf16.gmra.mrb[0].mxu0 %v253
        %v354 = vpop.f32.mrb[0].mxu0
        %v355 = vadd.f32 %v263, %v354
        %v356 = vpop.f32.mrb[0].mxu0
        %v357 = vpop.f32.mrb[0].mxu0
        %v358 = vadd.f32 %v263, %v357
        %v359 = vpop.f32.mrb[0].mxu0
        %360 = vmatprep.mubr.bf16.mxu0 0
        %361 = vmatmul.mubr.bf16.gmra.mrb[0].mxu0 %v254
        %v362 = vpop.f32.mrb[0].mxu0
        %v363 = vadd.f32 %v263, %v362
        %v364 = vpop.f32.mrb[0].mxu0
        %v365 = vpop.f32.mrb[0].mxu0
        %v366 = vadd.f32 %v263, %v365
        %v367 = vpop.f32.mrb[0].mxu0
        %368 = vmatprep.mubr.bf16.mxu0 0
        %369 = vmatmul.mubr.bf16.gmra.mrb[0].mxu0 %v255
        %v370 = vpop.f32.mrb[0].mxu0
        %v371 = vadd.f32 %v263, %v370
        %v372 = vpop.f32.mrb[0].mxu0
        %v373 = vpop.f32.mrb[0].mxu0
        %v374 = vadd.f32 %v263, %v373
        %v375 = vpop.f32.mrb[0].mxu0
        %376 = vmatprep.mubr.bf16.mxu0 0
        %377 = vmatmul.mubr.bf16.gmra.mrb[0].mxu0 %v256
        %v378 = vpop.f32.mrb[0].mxu0
        %v379 = vadd.f32 %v263, %v378
        %v380 = vpop.f32.mrb[0].mxu0
        %v381 = vpop.f32.mrb[0].mxu0
        %v382 = vadd.f32 %v263, %v381
        %v383 = vpop.f32.mrb[0].mxu0
        %384 = vmatprep.mubr.bf16.mxu0 0
        %385 = vmatmul.mubr.bf16.gmra.mrb[0].mxu0 %v257
        %v386 = vpop.f32.mrb[0].mxu0
        %v387 = vadd.f32 %v263, %v386
        %v388 = vpop.f32.mrb[0].mxu0
        %v389 = vpop.f32.mrb[0].mxu0
        %v390 = vadd.f32 %v263, %v389
        %v391 = vpop.f32.mrb[0].mxu0
        %392 = vmatprep.mubr.bf16.mxu0 0
        %393 = vmatmul.mubr.bf16.gmra.mrb[0].mxu0 %v258
        %v394 = vpop.f32.mrb[0].mxu0
        %v395 = vadd.f32 %v263, %v394
        %v396 = vpop.f32.mrb[0].mxu0
        %v397 = vpop.f32.mrb[0].mxu0
        %v398 = vadd.f32 %v263, %v397
        %v399 = vpop.f32.mrb[0].mxu0
        %400 = vmatprep.mubr.bf16.mxu0 0
        %401 = vmatmul.mubr.bf16.gmra.mrb[0].mxu0 %v259
        %v402 = vpop.f32.mrb[0].mxu0
        %v403 = vadd.f32 %v263, %v402
        %v404 = vpop.f32.mrb[0].mxu0
        %v405 = vpop.f32.mrb[0].mxu0
        %v406 = vadd.f32 %v263, %v405
        %v407 = vpop.f32.mrb[0].mxu0
        %408 = vdwg.mxu0
        %v409 = vmax.f32 %v347, 0.0
        %v410 = vmax.f32 %v350, 0.0
        %v411 = vmax.f32 %v355, 0.0
        %v412 = vmax.f32 %v358, 0.0
        %v413 = vmax.f32 %v363, 0.0
        %v414 = vmax.f32 %v366, 0.0
        %v415 = vmax.f32 %v371, 0.0
        %v416 = vmax.f32 %v374, 0.0
        %v417 = vmax.f32 %v379, 0.0
        %v418 = vmax.f32 %v382, 0.0
        %v419 = vmax.f32 %v387, 0.0
        %v420 = vmax.f32 %v390, 0.0
        %v421 = vmax.f32 %v395, 0.0
        %v422 = vmax.f32 %v398, 0.0
        %v423 = vmax.f32 %v403, 0.0
        %v424 = vmax.f32 %v406, 0.0
        %s425 = scalar_lea.vmem [#allocation5], 64
        %v426 = vld [vmem:[%s425] sm:$0xf]
        %v427 = vld [vmem:[%s425 + $0x4] sm:$0xf]
        %v428 = vld [vmem:[%s425 + $0x8] sm:$0xf]
        %v429 = vld [vmem:[%s425 + $0xc] sm:$0xf]
        %v430 = vld [vmem:[%s425 + $0x10] sm:$0xf]
        %v431 = vld [vmem:[%s425 + $0x14] sm:$0xf]
        %v432 = vld [vmem:[%s425 + $0x18] sm:$0xf]
        %v433 = vld [vmem:[%s425 + $0x1c] sm:$0xf]
        %v434 = vld [vmem:[%s425 + $0x20] sm:$0xf]
        %v435 = vld [vmem:[%s425 + $0x24] sm:$0xf]
        %v436 = vld [vmem:[%s425 + $0x28] sm:$0xf]
        %v437 = vld [vmem:[%s425 + $0x2c] sm:$0xf]
        %v438 = vld [vmem:[%s425 + $0x30] sm:$0xf]
        %v439 = vld [vmem:[%s425 + $0x34] sm:$0xf]
        %v440 = vld [vmem:[%s425 + $0x38] sm:$0xf]
        %v441 = vld [vmem:[%s425 + $0x3c] sm:$0xf]
        %v442 = vpack.c.bf16 %v410, %v409
        %v443 = vpack.c.bf16 %v412, %v411
        %v444 = vpack.c.bf16 %v414, %v413
        %v445 = vpack.c.bf16 %v416, %v415
        %v446 = vpack.c.bf16 %v418, %v417
        %v447 = vpack.c.bf16 %v420, %v419
        %v448 = vpack.c.bf16 %v422, %v421
        %v449 = vpack.c.bf16 %v424, %v423
        %v450 = vlaneseq
        %v451 = vshrl.u32 %v450, 7
        %v452 = vsub.s32 1, %v451
        %v453 = vrot.slane %v235, %v452
        %v470 = vunpack.c.l.b16 %v426
        %v471 = vunpack.c.l.b16 %v427
        %v472 = vunpack.c.l.b16 %v428
        %v473 = vunpack.c.l.b16 %v429
        %v474 = vunpack.c.l.b16 %v430
        %v475 = vunpack.c.l.b16 %v431
        %v476 = vunpack.c.l.b16 %v432
        %v477 = vunpack.c.l.b16 %v433
        %v478 = vunpack.c.l.b16 %v434
        %v479 = vunpack.c.l.b16 %v435
        %v480 = vunpack.c.l.b16 %v436
        %v481 = vunpack.c.l.b16 %v437
        %v482 = vunpack.c.l.b16 %v438
        %v483 = vunpack.c.l.b16 %v439
        %v484 = vunpack.c.l.b16 %v440
        %v485 = vunpack.c.l.b16 %v441
        %v486 = vpack.c.b16 %v471, %v470
        %v487 = vpack.c.b16 %v473, %v472
        %v488 = vpack.c.b16 %v475, %v474
        %v489 = vpack.c.b16 %v477, %v476
        %v490 = vpack.c.b16 %v479, %v478
        %v491 = vpack.c.b16 %v481, %v480
        %v492 = vpack.c.b16 %v483, %v482
        %v493 = vpack.c.b16 %v485, %v484
        %502 = vmatprep.subr.bf16.mxu0 0
        %503 = vmatpush1.bf16.msra.mxu0 %v486
        %504 = vmatprep.subr.bf16.mxu0 0
        %505 = vmatpush1.bf16.msra.mxu0 %v487
        %506 = vmatprep.subr.bf16.mxu0 0
        %507 = vmatpush1.bf16.msra.mxu0 %v488
        %508 = vmatprep.subr.bf16.mxu0 0
        %509 = vmatpush1.bf16.msra.mxu0 %v489
        %510 = vmatprep.subr.bf16.mxu0 0
        %511 = vmatpush1.bf16.msra.mxu0 %v490
        %512 = vmatprep.subr.bf16.mxu0 0
        %513 = vmatpush1.bf16.msra.mxu0 %v491
        %514 = vmatprep.subr.bf16.mxu0 0
        %515 = vmatpush1.bf16.msra.mxu0 %v492
        %516 = vmatprep.subr.bf16.mxu0 0
        %517 = vmatpush1.bf16.msra.mxu0 %v493
        %518 = vmatprep.subr.bf16.mxu0 0
        %519 = vmatpush1.bf16.msra.mxu0 0
        %520 = vmatprep.subr.bf16.mxu0 0
        %521 = vmatpush1.bf16.msra.mxu0 0
        %522 = vmatprep.subr.bf16.mxu0 0
        %523 = vmatpush1.bf16.msra.mxu0 0
        %524 = vmatprep.subr.bf16.mxu0 0
        %525 = vmatpush1.bf16.msra.mxu0 0
        %526 = vmatprep.subr.bf16.mxu0 0
        %527 = vmatpush1.bf16.msra.mxu0 0
        %528 = vmatprep.subr.bf16.mxu0 0
        %529 = vmatpush1.bf16.msra.mxu0 0
        %530 = vmatprep.subr.bf16.mxu0 0
        %531 = vmatpush1.bf16.msra.mxu0 0
        %532 = vmatprep.subr.bf16.mxu0 0
        %533 = vmatpush1.bf16.msra.mxu0 0
        %534 = vmatprep.mubr.bf16.mxu0 0
        %535 = vmatmul.mubr.bf16.gmra.mrb[0].mxu0 %v442
        %v536 = vpop.f32.mrb[0].mxu0
        %v537 = vadd.f32 %v453, %v536
        %v538 = vpop.f32.mrb[0].mxu0
        %v539 = vpop.f32.mrb[0].mxu0
        %v540 = vadd.f32 %v453, %v539
        %v541 = vpop.f32.mrb[0].mxu0
        %542 = vmatprep.mubr.bf16.mxu0 0
        %543 = vmatmul.mubr.bf16.gmra.mrb[0].mxu0 %v443
        %v544 = vpop.f32.mrb[0].mxu0
        %v545 = vadd.f32 %v453, %v544
        %v546 = vpop.f32.mrb[0].mxu0
        %v547 = vpop.f32.mrb[0].mxu0
        %v548 = vadd.f32 %v453, %v547
        %v549 = vpop.f32.mrb[0].mxu0
        %550 = vmatprep.mubr.bf16.mxu0 0
        %551 = vmatmul.mubr.bf16.gmra.mrb[0].mxu0 %v444
        %v552 = vpop.f32.mrb[0].mxu0
        %v553 = vadd.f32 %v453, %v552
        %v554 = vpop.f32.mrb[0].mxu0
        %v555 = vpop.f32.mrb[0].mxu0
        %v556 = vadd.f32 %v453, %v555
        %v557 = vpop.f32.mrb[0].mxu0
        %558 = vmatprep.mubr.bf16.mxu0 0
        %559 = vmatmul.mubr.bf16.gmra.mrb[0].mxu0 %v445
        %v560 = vpop.f32.mrb[0].mxu0
        %v561 = vadd.f32 %v453, %v560
        %v562 = vpop.f32.mrb[0].mxu0
        %v563 = vpop.f32.mrb[0].mxu0
        %v564 = vadd.f32 %v453, %v563
        %v565 = vpop.f32.mrb[0].mxu0
        %566 = vmatprep.mubr.bf16.mxu0 0
        %567 = vmatmul.mubr.bf16.gmra.mrb[0].mxu0 %v446
        %v568 = vpop.f32.mrb[0].mxu0
        %v569 = vadd.f32 %v453, %v568
        %v570 = vpop.f32.mrb[0].mxu0
        %v571 = vpop.f32.mrb[0].mxu0
        %v572 = vadd.f32 %v453, %v571
        %v573 = vpop.f32.mrb[0].mxu0
        %574 = vmatprep.mubr.bf16.mxu0 0
        %575 = vmatmul.mubr.bf16.gmra.mrb[0].mxu0 %v447
        %v576 = vpop.f32.mrb[0].mxu0
        %v577 = vadd.f32 %v453, %v576
        %v578 = vpop.f32.mrb[0].mxu0
        %v579 = vpop.f32.mrb[0].mxu0
        %v580 = vadd.f32 %v453, %v579
        %v581 = vpop.f32.mrb[0].mxu0
        %582 = vmatprep.mubr.bf16.mxu0 0
        %583 = vmatmul.mubr.bf16.gmra.mrb[0].mxu0 %v448
        %v584 = vpop.f32.mrb[0].mxu0
        %v585 = vadd.f32 %v453, %v584
        %v586 = vpop.f32.mrb[0].mxu0
        %v587 = vpop.f32.mrb[0].mxu0
        %v588 = vadd.f32 %v453, %v587
        %v589 = vpop.f32.mrb[0].mxu0
        %590 = vmatprep.mubr.bf16.mxu0 0
        %591 = vmatmul.mubr.bf16.gmra.mrb[0].mxu0 %v449
        %v592 = vpop.f32.mrb[0].mxu0
        %v593 = vadd.f32 %v453, %v592
        %v594 = vpop.f32.mrb[0].mxu0
        %v595 = vpop.f32.mrb[0].mxu0
        %v596 = vadd.f32 %v453, %v595
        %v597 = vpop.f32.mrb[0].mxu0
        %598 = vdwg.mxu0
        %v599 = vmax.f32 %v537, 0.0
        %v600 = vmax.f32 %v540, 0.0
        %v601 = vmax.f32 %v545, 0.0
        %v602 = vmax.f32 %v548, 0.0
        %v603 = vmax.f32 %v553, 0.0
        %v604 = vmax.f32 %v556, 0.0
        %v605 = vmax.f32 %v561, 0.0
        %v606 = vmax.f32 %v564, 0.0
        %v607 = vmax.f32 %v569, 0.0
        %v608 = vmax.f32 %v572, 0.0
        %v609 = vmax.f32 %v577, 0.0
        %v610 = vmax.f32 %v580, 0.0
        %v611 = vmax.f32 %v585, 0.0
        %v612 = vmax.f32 %v588, 0.0
        %v613 = vmax.f32 %v593, 0.0
        %v614 = vmax.f32 %v596, 0.0
        %s615 = scalar_lea.vmem [#allocation5], 128
        %v616 = vld [vmem:[%s615] sm:$0xf]
        %v617 = vld [vmem:[%s615 + $0x4] sm:$0xf]
        %v618 = vld [vmem:[%s615 + $0x8] sm:$0xf]
        %v619 = vld [vmem:[%s615 + $0xc] sm:$0xf]
        %v620 = vld [vmem:[%s615 + $0x10] sm:$0xf]
        %v621 = vld [vmem:[%s615 + $0x14] sm:$0xf]
        %v622 = vld [vmem:[%s615 + $0x18] sm:$0xf]
        %v623 = vld [vmem:[%s615 + $0x1c] sm:$0xf]
        %v624 = vld [vmem:[%s615 + $0x20] sm:$0xf]
        %v625 = vld [vmem:[%s615 + $0x24] sm:$0xf]
        %v626 = vld [vmem:[%s615 + $0x28] sm:$0xf]
        %v627 = vld [vmem:[%s615 + $0x2c] sm:$0xf]
        %v628 = vld [vmem:[%s615 + $0x30] sm:$0xf]
        %v629 = vld [vmem:[%s615 + $0x34] sm:$0xf]
        %v630 = vld [vmem:[%s615 + $0x38] sm:$0xf]
        %v631 = vld [vmem:[%s615 + $0x3c] sm:$0xf]
        %v632 = vpack.c.bf16 %v600, %v599
        %v633 = vpack.c.bf16 %v602, %v601
        %v634 = vpack.c.bf16 %v604, %v603
        %v635 = vpack.c.bf16 %v606, %v605
        %v636 = vpack.c.bf16 %v608, %v607
        %v637 = vpack.c.bf16 %v610, %v609
        %v638 = vpack.c.bf16 %v612, %v611
        %v639 = vpack.c.bf16 %v614, %v613
        %v640 = vlaneseq
        %v641 = vshrl.u32 %v640, 7
        %v642 = vsub.s32 2, %v641
        %v643 = vrot.slane %v235, %v642
        %v660 = vunpack.c.l.b16 %v616
        %v661 = vunpack.c.l.b16 %v617
        %v662 = vunpack.c.l.b16 %v618
        %v663 = vunpack.c.l.b16 %v619
        %v664 = vunpack.c.l.b16 %v620
        %v665 = vunpack.c.l.b16 %v621
        %v666 = vunpack.c.l.b16 %v622
        %v667 = vunpack.c.l.b16 %v623
        %v668 = vunpack.c.l.b16 %v624
        %v669 = vunpack.c.l.b16 %v625
        %v670 = vunpack.c.l.b16 %v626
        %v671 = vunpack.c.l.b16 %v627
        %v672 = vunpack.c.l.b16 %v628
        %v673 = vunpack.c.l.b16 %v629
        %v674 = vunpack.c.l.b16 %v630
        %v675 = vunpack.c.l.b16 %v631
        %v676 = vpack.c.b16 %v661, %v660
        %v677 = vpack.c.b16 %v663, %v662
        %v678 = vpack.c.b16 %v665, %v664
        %v679 = vpack.c.b16 %v667, %v666
        %v680 = vpack.c.b16 %v669, %v668
        %v681 = vpack.c.b16 %v671, %v670
        %v682 = vpack.c.b16 %v673, %v672
        %v683 = vpack.c.b16 %v675, %v674
        %692 = vmatprep.subr.bf16.mxu0 0
        %693 = vmatpush1.bf16.msra.mxu0 %v676
        %694 = vmatprep.subr.bf16.mxu0 0
        %695 = vmatpush1.bf16.msra.mxu0 %v677
        %696 = vmatprep.subr.bf16.mxu0 0
        %697 = vmatpush1.bf16.msra.mxu0 %v678
        %698 = vmatprep.subr.bf16.mxu0 0
        %699 = vmatpush1.bf16.msra.mxu0 %v679
        %700 = vmatprep.subr.bf16.mxu0 0
        %701 = vmatpush1.bf16.msra.mxu0 %v680
        %702 = vmatprep.subr.bf16.mxu0 0
        %703 = vmatpush1.bf16.msra.mxu0 %v681
        %704 = vmatprep.subr.bf16.mxu0 0
        %705 = vmatpush1.bf16.msra.mxu0 %v682
        %706 = vmatprep.subr.bf16.mxu0 0
        %707 = vmatpush1.bf16.msra.mxu0 %v683
        %708 = vmatprep.subr.bf16.mxu0 0
        %709 = vmatpush1.bf16.msra.mxu0 0
        %710 = vmatprep.subr.bf16.mxu0 0
        %711 = vmatpush1.bf16.msra.mxu0 0
        %712 = vmatprep.subr.bf16.mxu0 0
        %713 = vmatpush1.bf16.msra.mxu0 0
        %714 = vmatprep.subr.bf16.mxu0 0
        %715 = vmatpush1.bf16.msra.mxu0 0
        %716 = vmatprep.subr.bf16.mxu0 0
        %717 = vmatpush1.bf16.msra.mxu0 0
        %718 = vmatprep.subr.bf16.mxu0 0
        %719 = vmatpush1.bf16.msra.mxu0 0
        %720 = vmatprep.subr.bf16.mxu0 0
        %721 = vmatpush1.bf16.msra.mxu0 0
        %722 = vmatprep.subr.bf16.mxu0 0
        %723 = vmatpush1.bf16.msra.mxu0 0
        %724 = vmatprep.mubr.bf16.mxu0 0
        %725 = vmatmul.mubr.bf16.gmra.mrb[0].mxu0 %v632
        %v726 = vpop.f32.mrb[0].mxu0
        %v727 = vadd.f32 %v643, %v726
        %v728 = vpop.f32.mrb[0].mxu0
        %v729 = vpop.f32.mrb[0].mxu0
        %v730 = vadd.f32 %v643, %v729
        %v731 = vpop.f32.mrb[0].mxu0
        %732 = vmatprep.mubr.bf16.mxu0 0
        %733 = vmatmul.mubr.bf16.gmra.mrb[0].mxu0 %v633
        %v734 = vpop.f32.mrb[0].mxu0
        %v735 = vadd.f32 %v643, %v734
        %v736 = vpop.f32.mrb[0].mxu0
        %v737 = vpop.f32.mrb[0].mxu0
        %v738 = vadd.f32 %v643, %v737
        %v739 = vpop.f32.mrb[0].mxu0
        %740 = vmatprep.mubr.bf16.mxu0 0
        %741 = vmatmul.mubr.bf16.gmra.mrb[0].mxu0 %v634
        %v742 = vpop.f32.mrb[0].mxu0
        %v743 = vadd.f32 %v643, %v742
        %v744 = vpop.f32.mrb[0].mxu0
        %v745 = vpop.f32.mrb[0].mxu0
        %v746 = vadd.f32 %v643, %v745
        %v747 = vpop.f32.mrb[0].mxu0
        %748 = vmatprep.mubr.bf16.mxu0 0
        %749 = vmatmul.mubr.bf16.gmra.mrb[0].mxu0 %v635
        %v750 = vpop.f32.mrb[0].mxu0
        %v751 = vadd.f32 %v643, %v750
        %v752 = vpop.f32.mrb[0].mxu0
        %v753 = vpop.f32.mrb[0].mxu0
        %v754 = vadd.f32 %v643, %v753
        %v755 = vpop.f32.mrb[0].mxu0
        %756 = vmatprep.mubr.bf16.mxu0 0
        %757 = vmatmul.mubr.bf16.gmra.mrb[0].mxu0 %v636
        %v758 = vpop.f32.mrb[0].mxu0
        %v759 = vadd.f32 %v643, %v758
        %v760 = vpop.f32.mrb[0].mxu0
        %v761 = vpop.f32.mrb[0].mxu0
        %v762 = vadd.f32 %v643, %v761
        %v763 = vpop.f32.mrb[0].mxu0
        %764 = vmatprep.mubr.bf16.mxu0 0
        %765 = vmatmul.mubr.bf16.gmra.mrb[0].mxu0 %v637
        %v766 = vpop.f32.mrb[0].mxu0
        %v767 = vadd.f32 %v643, %v766
        %v768 = vpop.f32.mrb[0].mxu0
        %v769 = vpop.f32.mrb[0].mxu0
        %v770 = vadd.f32 %v643, %v769
        %v771 = vpop.f32.mrb[0].mxu0
        %772 = vmatprep.mubr.bf16.mxu0 0
        %773 = vmatmul.mubr.bf16.gmra.mrb[0].mxu0 %v638
        %v774 = vpop.f32.mrb[0].mxu0
        %v775 = vadd.f32 %v643, %v774
        %v776 = vpop.f32.mrb[0].mxu0
        %v777 = vpop.f32.mrb[0].mxu0
        %v778 = vadd.f32 %v643, %v777
        %v779 = vpop.f32.mrb[0].mxu0
        %780 = vmatprep.mubr.bf16.mxu0 0
        %781 = vmatmul.mubr.bf16.gmra.mrb[0].mxu0 %v639
        %v782 = vpop.f32.mrb[0].mxu0
        %v783 = vadd.f32 %v643, %v782
        %v784 = vpop.f32.mrb[0].mxu0
        %v785 = vpop.f32.mrb[0].mxu0
        %v786 = vadd.f32 %v643, %v785
        %v787 = vpop.f32.mrb[0].mxu0
        %788 = vdwg.mxu0
        %v789 = vmax.f32 %v727, 0.0
        %v790 = vmax.f32 %v730, 0.0
        %v791 = vmax.f32 %v735, 0.0
        %v792 = vmax.f32 %v738, 0.0
        %v793 = vmax.f32 %v743, 0.0
        %v794 = vmax.f32 %v746, 0.0
        %v795 = vmax.f32 %v751, 0.0
        %v796 = vmax.f32 %v754, 0.0
        %v797 = vmax.f32 %v759, 0.0
        %v798 = vmax.f32 %v762, 0.0
        %v799 = vmax.f32 %v767, 0.0
        %v800 = vmax.f32 %v770, 0.0
        %v801 = vmax.f32 %v775, 0.0
        %v802 = vmax.f32 %v778, 0.0
        %v803 = vmax.f32 %v783, 0.0
        %v804 = vmax.f32 %v786, 0.0
        %s805 = scalar_lea.vmem [#allocation5], 192
        %v806 = vld [vmem:[%s805] sm:$0xf]
        %v807 = vld [vmem:[%s805 + $0x4] sm:$0xf]
        %v808 = vld [vmem:[%s805 + $0x8] sm:$0xf]
        %v809 = vld [vmem:[%s805 + $0xc] sm:$0xf]
        %v810 = vld [vmem:[%s805 + $0x10] sm:$0xf]
        %v811 = vld [vmem:[%s805 + $0x14] sm:$0xf]
        %v812 = vld [vmem:[%s805 + $0x18] sm:$0xf]
        %v813 = vld [vmem:[%s805 + $0x1c] sm:$0xf]
        %v814 = vld [vmem:[%s805 + $0x20] sm:$0xf]
        %v815 = vld [vmem:[%s805 + $0x24] sm:$0xf]
        %v816 = vld [vmem:[%s805 + $0x28] sm:$0xf]
        %v817 = vld [vmem:[%s805 + $0x2c] sm:$0xf]
        %v818 = vld [vmem:[%s805 + $0x30] sm:$0xf]
        %v819 = vld [vmem:[%s805 + $0x34] sm:$0xf]
        %v820 = vld [vmem:[%s805 + $0x38] sm:$0xf]
        %v821 = vld [vmem:[%s805 + $0x3c] sm:$0xf]
        %v822 = vpack.c.bf16 %v790, %v789
        %v823 = vpack.c.bf16 %v792, %v791
        %v824 = vpack.c.bf16 %v794, %v793
        %v825 = vpack.c.bf16 %v796, %v795
        %v826 = vpack.c.bf16 %v798, %v797
        %v827 = vpack.c.bf16 %v800, %v799
        %v828 = vpack.c.bf16 %v802, %v801
        %v829 = vpack.c.bf16 %v804, %v803
        %v830 = vlaneseq
        %v831 = vshrl.u32 %v830, 7
        %v832 = vsub.s32 3, %v831
        %v833 = vrot.slane %v235, %v832
        %v850 = vunpack.c.l.b16 %v806
        %v851 = vunpack.c.l.b16 %v807
        %v852 = vunpack.c.l.b16 %v808
        %v853 = vunpack.c.l.b16 %v809
        %v854 = vunpack.c.l.b16 %v810
        %v855 = vunpack.c.l.b16 %v811
        %v856 = vunpack.c.l.b16 %v812
        %v857 = vunpack.c.l.b16 %v813
        %v858 = vunpack.c.l.b16 %v814
        %v859 = vunpack.c.l.b16 %v815
        %v860 = vunpack.c.l.b16 %v816
        %v861 = vunpack.c.l.b16 %v817
        %v862 = vunpack.c.l.b16 %v818
        %v863 = vunpack.c.l.b16 %v819
        %v864 = vunpack.c.l.b16 %v820
        %v865 = vunpack.c.l.b16 %v821
        %v866 = vpack.c.b16 %v851, %v850
        %v867 = vpack.c.b16 %v853, %v852
        %v868 = vpack.c.b16 %v855, %v854
        %v869 = vpack.c.b16 %v857, %v856
        %v870 = vpack.c.b16 %v859, %v858
        %v871 = vpack.c.b16 %v861, %v860
        %v872 = vpack.c.b16 %v863, %v862
        %v873 = vpack.c.b16 %v865, %v864
        %882 = vmatprep.subr.bf16.mxu0 0
        %883 = vmatpush1.bf16.msra.mxu0 %v866
        %884 = vmatprep.subr.bf16.mxu0 0
        %885 = vmatpush1.bf16.msra.mxu0 %v867
        %886 = vmatprep.subr.bf16.mxu0 0
        %887 = vmatpush1.bf16.msra.mxu0 %v868
        %888 = vmatprep.subr.bf16.mxu0 0
        %889 = vmatpush1.bf16.msra.mxu0 %v869
        %890 = vmatprep.subr.bf16.mxu0 0
        %891 = vmatpush1.bf16.msra.mxu0 %v870
        %892 = vmatprep.subr.bf16.mxu0 0
        %893 = vmatpush1.bf16.msra.mxu0 %v871
        %894 = vmatprep.subr.bf16.mxu0 0
        %895 = vmatpush1.bf16.msra.mxu0 %v872
        %896 = vmatprep.subr.bf16.mxu0 0
        %897 = vmatpush1.bf16.msra.mxu0 %v873
        %898 = vmatprep.subr.bf16.mxu0 0
        %899 = vmatpush1.bf16.msra.mxu0 0
        %900 = vmatprep.subr.bf16.mxu0 0
        %901 = vmatpush1.bf16.msra.mxu0 0
        %902 = vmatprep.subr.bf16.mxu0 0
        %903 = vmatpush1.bf16.msra.mxu0 0
        %904 = vmatprep.subr.bf16.mxu0 0
        %905 = vmatpush1.bf16.msra.mxu0 0
        %906 = vmatprep.subr.bf16.mxu0 0
        %907 = vmatpush1.bf16.msra.mxu0 0
        %908 = vmatprep.subr.bf16.mxu0 0
        %909 = vmatpush1.bf16.msra.mxu0 0
        %910 = vmatprep.subr.bf16.mxu0 0
        %911 = vmatpush1.bf16.msra.mxu0 0
        %912 = vmatprep.subr.bf16.mxu0 0
        %913 = vmatpush1.bf16.msra.mxu0 0
        %914 = vmatprep.mubr.bf16.mxu0 0
        %915 = vmatmul.mubr.bf16.gmra.mrb[0].mxu0 %v822
        %v916 = vpop.f32.mrb[0].mxu0
        %v917 = vadd.f32 %v833, %v916
        %v918 = vpop.f32.mrb[0].mxu0
        %v919 = vpop.f32.mrb[0].mxu0
        %v920 = vadd.f32 %v833, %v919
        %v921 = vpop.f32.mrb[0].mxu0
        %922 = vmatprep.mubr.bf16.mxu0 0
        %923 = vmatmul.mubr.bf16.gmra.mrb[0].mxu0 %v823
        %v924 = vpop.f32.mrb[0].mxu0
        %v925 = vadd.f32 %v833, %v924
        %v926 = vpop.f32.mrb[0].mxu0
        %v927 = vpop.f32.mrb[0].mxu0
        %v928 = vadd.f32 %v833, %v927
        %v929 = vpop.f32.mrb[0].mxu0
        %930 = vmatprep.mubr.bf16.mxu0 0
        %931 = vmatmul.mubr.bf16.gmra.mrb[0].mxu0 %v824
        %v932 = vpop.f32.mrb[0].mxu0
        %v933 = vadd.f32 %v833, %v932
        %v934 = vpop.f32.mrb[0].mxu0
        %v935 = vpop.f32.mrb[0].mxu0
        %v936 = vadd.f32 %v833, %v935
        %v937 = vpop.f32.mrb[0].mxu0
        %938 = vmatprep.mubr.bf16.mxu0 0
        %939 = vmatmul.mubr.bf16.gmra.mrb[0].mxu0 %v825
        %v940 = vpop.f32.mrb[0].mxu0
        %v941 = vadd.f32 %v833, %v940
        %v942 = vpop.f32.mrb[0].mxu0
        %v943 = vpop.f32.mrb[0].mxu0
        %v944 = vadd.f32 %v833, %v943
        %v945 = vpop.f32.mrb[0].mxu0
        %946 = vmatprep.mubr.bf16.mxu0 0
        %947 = vmatmul.mubr.bf16.gmra.mrb[0].mxu0 %v826
        %v948 = vpop.f32.mrb[0].mxu0
        %v949 = vadd.f32 %v833, %v948
        %v950 = vpop.f32.mrb[0].mxu0
        %v951 = vpop.f32.mrb[0].mxu0
        %v952 = vadd.f32 %v833, %v951
        %v953 = vpop.f32.mrb[0].mxu0
        %954 = vmatprep.mubr.bf16.mxu0 0
        %955 = vmatmul.mubr.bf16.gmra.mrb[0].mxu0 %v827
        %v956 = vpop.f32.mrb[0].mxu0
        %v957 = vadd.f32 %v833, %v956
        %v958 = vpop.f32.mrb[0].mxu0
        %v959 = vpop.f32.mrb[0].mxu0
        %v960 = vadd.f32 %v833, %v959
        %v961 = vpop.f32.mrb[0].mxu0
        %962 = vmatprep.mubr.bf16.mxu0 0
        %963 = vmatmul.mubr.bf16.gmra.mrb[0].mxu0 %v828
        %v964 = vpop.f32.mrb[0].mxu0
        %v965 = vadd.f32 %v833, %v964
        %v966 = vpop.f32.mrb[0].mxu0
        %v967 = vpop.f32.mrb[0].mxu0
        %v968 = vadd.f32 %v833, %v967
        %v969 = vpop.f32.mrb[0].mxu0
        %970 = vmatprep.mubr.bf16.mxu0 0
        %971 = vmatmul.mubr.bf16.gmra.mrb[0].mxu0 %v829
        %v972 = vpop.f32.mrb[0].mxu0
        %v973 = vadd.f32 %v833, %v972
        %v974 = vpop.f32.mrb[0].mxu0
        %v975 = vpop.f32.mrb[0].mxu0
        %v976 = vadd.f32 %v833, %v975
        %v977 = vpop.f32.mrb[0].mxu0
        %978 = vdwg.mxu0
        %s979 = scalar_lea.vmem [#allocation5], 256
        %v980 = vld [vmem:[%s979] sm:$0xf]
        %v981 = vld [vmem:[%s979 + $0x4] sm:$0xf]
        %v982 = vld [vmem:[%s979 + $0x8] sm:$0xf]
        %v983 = vld [vmem:[%s979 + $0xc] sm:$0xf]
        %v984 = vld [vmem:[%s979 + $0x10] sm:$0xf]
        %v985 = vld [vmem:[%s979 + $0x14] sm:$0xf]
        %v986 = vld [vmem:[%s979 + $0x18] sm:$0xf]
        %v987 = vld [vmem:[%s979 + $0x1c] sm:$0xf]
        %v988 = vld [vmem:[%s979 + $0x20] sm:$0xf]
        %v989 = vld [vmem:[%s979 + $0x24] sm:$0xf]
        %v990 = vld [vmem:[%s979 + $0x28] sm:$0xf]
        %v991 = vld [vmem:[%s979 + $0x2c] sm:$0xf]
        %v992 = vld [vmem:[%s979 + $0x30] sm:$0xf]
        %v993 = vld [vmem:[%s979 + $0x34] sm:$0xf]
        %v994 = vld [vmem:[%s979 + $0x38] sm:$0xf]
        %v995 = vld [vmem:[%s979 + $0x3c] sm:$0xf]
        %v996 = vpack.c.bf16 %v920, %v917
        %v997 = vpack.c.bf16 %v928, %v925
        %v998 = vpack.c.bf16 %v936, %v933
        %v999 = vpack.c.bf16 %v944, %v941
        %v1000 = vpack.c.bf16 %v952, %v949
        %v1001 = vpack.c.bf16 %v960, %v957
        %v1002 = vpack.c.bf16 %v968, %v965
        %v1003 = vpack.c.bf16 %v976, %v973
        %v1004 = vlaneseq
        %v1005 = vshrl.u32 %v1004, 7
        %v1006 = vsub.s32 4, %v1005
        %v1007 = vrot.slane %v235, %v1006
        %v1024 = vunpack.c.l.b16 %v980
        %v1025 = vunpack.c.l.b16 %v981
        %v1026 = vunpack.c.l.b16 %v982
        %v1027 = vunpack.c.l.b16 %v983
        %v1028 = vunpack.c.l.b16 %v984
        %v1029 = vunpack.c.l.b16 %v985
        %v1030 = vunpack.c.l.b16 %v986
        %v1031 = vunpack.c.l.b16 %v987
        %v1032 = vunpack.c.l.b16 %v988
        %v1033 = vunpack.c.l.b16 %v989
        %v1034 = vunpack.c.l.b16 %v990
        %v1035 = vunpack.c.l.b16 %v991
        %v1036 = vunpack.c.l.b16 %v992
        %v1037 = vunpack.c.l.b16 %v993
        %v1038 = vunpack.c.l.b16 %v994
        %v1039 = vunpack.c.l.b16 %v995
        %v1040 = vpack.c.b16 %v1025, %v1024
        %v1041 = vpack.c.b16 %v1027, %v1026
        %v1042 = vpack.c.b16 %v1029, %v1028
        %v1043 = vpack.c.b16 %v1031, %v1030
        %v1044 = vpack.c.b16 %v1033, %v1032
        %v1045 = vpack.c.b16 %v1035, %v1034
        %v1046 = vpack.c.b16 %v1037, %v1036
        %v1047 = vpack.c.b16 %v1039, %v1038
        %1056 = vmatprep.subr.bf16.mxu0 0
        %1057 = vmatpush1.bf16.msra.mxu0 %v1040
        %1058 = vmatprep.subr.bf16.mxu0 0
        %1059 = vmatpush1.bf16.msra.mxu0 %v1041
        %1060 = vmatprep.subr.bf16.mxu0 0
        %1061 = vmatpush1.bf16.msra.mxu0 %v1042
        %1062 = vmatprep.subr.bf16.mxu0 0
        %1063 = vmatpush1.bf16.msra.mxu0 %v1043
        %1064 = vmatprep.subr.bf16.mxu0 0
        %1065 = vmatpush1.bf16.msra.mxu0 %v1044
        %1066 = vmatprep.subr.bf16.mxu0 0
        %1067 = vmatpush1.bf16.msra.mxu0 %v1045
        %1068 = vmatprep.subr.bf16.mxu0 0
        %1069 = vmatpush1.bf16.msra.mxu0 %v1046
        %1070 = vmatprep.subr.bf16.mxu0 0
        %1071 = vmatpush1.bf16.msra.mxu0 %v1047
        %1072 = vmatprep.subr.bf16.mxu0 0
        %1073 = vmatpush1.bf16.msra.mxu0 0
        %1074 = vmatprep.subr.bf16.mxu0 0
        %1075 = vmatpush1.bf16.msra.mxu0 0
        %1076 = vmatprep.subr.bf16.mxu0 0
        %1077 = vmatpush1.bf16.msra.mxu0 0
        %1078 = vmatprep.subr.bf16.mxu0 0
        %1079 = vmatpush1.bf16.msra.mxu0 0
        %1080 = vmatprep.subr.bf16.mxu0 0
        %1081 = vmatpush1.bf16.msra.mxu0 0
        %1082 = vmatprep.subr.bf16.mxu0 0
        %1083 = vmatpush1.bf16.msra.mxu0 0
        %1084 = vmatprep.subr.bf16.mxu0 0
        %1085 = vmatpush1.bf16.msra.mxu0 0
        %1086 = vmatprep.subr.bf16.mxu0 0
        %1087 = vmatpush1.bf16.msra.mxu0 0
        %1088 = vmatprep.mubr.bf16.mxu0 0
        %1089 = vmatmul.mubr.bf16.gmra.mrb[0].mxu0 %v996
        %v1090 = vpop.f32.mrb[0].mxu0
        %v1091 = vadd.f32 %v1007, %v1090
        %v1092 = vpop.f32.mrb[0].mxu0
        %v1093 = vpop.f32.mrb[0].mxu0
        %v1094 = vadd.f32 %v1007, %v1093
        %v1095 = vpop.f32.mrb[0].mxu0
        %1096 = vmatprep.mubr.bf16.mxu0 0
        %1097 = vmatmul.mubr.bf16.gmra.mrb[0].mxu0 %v997
        %v1098 = vpop.f32.mrb[0].mxu0
        %v1099 = vadd.f32 %v1007, %v1098
        %v1100 = vpop.f32.mrb[0].mxu0
        %v1101 = vpop.f32.mrb[0].mxu0
        %v1102 = vadd.f32 %v1007, %v1101
        %v1103 = vpop.f32.mrb[0].mxu0
        %1104 = vmatprep.mubr.bf16.mxu0 0
        %1105 = vmatmul.mubr.bf16.gmra.mrb[0].mxu0 %v998
        %v1106 = vpop.f32.mrb[0].mxu0
        %v1107 = vadd.f32 %v1007, %v1106
        %v1108 = vpop.f32.mrb[0].mxu0
        %v1109 = vpop.f32.mrb[0].mxu0
        %v1110 = vadd.f32 %v1007, %v1109
        %v1111 = vpop.f32.mrb[0].mxu0
        %1112 = vmatprep.mubr.bf16.mxu0 0
        %1113 = vmatmul.mubr.bf16.gmra.mrb[0].mxu0 %v999
        %v1114 = vpop.f32.mrb[0].mxu0
        %v1115 = vadd.f32 %v1007, %v1114
        %v1116 = vpop.f32.mrb[0].mxu0
        %v1117 = vpop.f32.mrb[0].mxu0
        %v1118 = vadd.f32 %v1007, %v1117
        %v1119 = vpop.f32.mrb[0].mxu0
        %1120 = vmatprep.mubr.bf16.mxu0 0
        %1121 = vmatmul.mubr.bf16.gmra.mrb[0].mxu0 %v1000
        %v1122 = vpop.f32.mrb[0].mxu0
        %v1123 = vadd.f32 %v1007, %v1122
        %v1124 = vpop.f32.mrb[0].mxu0
        %v1125 = vpop.f32.mrb[0].mxu0
        %v1126 = vadd.f32 %v1007, %v1125
        %v1127 = vpop.f32.mrb[0].mxu0
        %1128 = vmatprep.mubr.bf16.mxu0 0
        %1129 = vmatmul.mubr.bf16.gmra.mrb[0].mxu0 %v1001
        %v1130 = vpop.f32.mrb[0].mxu0
        %v1131 = vadd.f32 %v1007, %v1130
        %v1132 = vpop.f32.mrb[0].mxu0
        %v1133 = vpop.f32.mrb[0].mxu0
        %v1134 = vadd.f32 %v1007, %v1133
        %v1135 = vpop.f32.mrb[0].mxu0
        %1136 = vmatprep.mubr.bf16.mxu0 0
        %1137 = vmatmul.mubr.bf16.gmra.mrb[0].mxu0 %v1002
        %v1138 = vpop.f32.mrb[0].mxu0
        %v1139 = vadd.f32 %v1007, %v1138
        %v1140 = vpop.f32.mrb[0].mxu0
        %v1141 = vpop.f32.mrb[0].mxu0
        %v1142 = vadd.f32 %v1007, %v1141
        %v1143 = vpop.f32.mrb[0].mxu0
        %1144 = vmatprep.mubr.bf16.mxu0 0
        %1145 = vmatmul.mubr.bf16.gmra.mrb[0].mxu0 %v1003
        %v1146 = vpop.f32.mrb[0].mxu0
        %v1147 = vadd.f32 %v1007, %v1146
        %v1148 = vpop.f32.mrb[0].mxu0
        %v1149 = vpop.f32.mrb[0].mxu0
        %v1150 = vadd.f32 %v1007, %v1149
        %v1151 = vpop.f32.mrb[0].mxu0
        %1152 = vdwg.mxu0
        %v1153 = vmax.f32 %v1091, 0.0
        %v1154 = vmax.f32 %v1094, 0.0
        %v1155 = vmax.f32 %v1099, 0.0
        %v1156 = vmax.f32 %v1102, 0.0
        %v1157 = vmax.f32 %v1107, 0.0
        %v1158 = vmax.f32 %v1110, 0.0
        %v1159 = vmax.f32 %v1115, 0.0
        %v1160 = vmax.f32 %v1118, 0.0
        %v1161 = vmax.f32 %v1123, 0.0
        %v1162 = vmax.f32 %v1126, 0.0
        %v1163 = vmax.f32 %v1131, 0.0
        %v1164 = vmax.f32 %v1134, 0.0
        %v1165 = vmax.f32 %v1139, 0.0
        %v1166 = vmax.f32 %v1142, 0.0
        %v1167 = vmax.f32 %v1147, 0.0
        %v1168 = vmax.f32 %v1150, 0.0
        %s1169 = scalar_lea.vmem [#allocation5], 320
        %v1170 = vld [vmem:[%s1169] sm:$0xf]
        %v1171 = vld [vmem:[%s1169 + $0x4] sm:$0xf]
        %v1172 = vld [vmem:[%s1169 + $0x8] sm:$0xf]
        %v1173 = vld [vmem:[%s1169 + $0xc] sm:$0xf]
        %v1174 = vld [vmem:[%s1169 + $0x10] sm:$0xf]
        %v1175 = vld [vmem:[%s1169 + $0x14] sm:$0xf]
        %v1176 = vld [vmem:[%s1169 + $0x18] sm:$0xf]
        %v1177 = vld [vmem:[%s1169 + $0x1c] sm:$0xf]
        %v1178 = vld [vmem:[%s1169 + $0x20] sm:$0xf]
        %v1179 = vld [vmem:[%s1169 + $0x24] sm:$0xf]
        %v1180 = vld [vmem:[%s1169 + $0x28] sm:$0xf]
        %v1181 = vld [vmem:[%s1169 + $0x2c] sm:$0xf]
        %v1182 = vld [vmem:[%s1169 + $0x30] sm:$0xf]
        %v1183 = vld [vmem:[%s1169 + $0x34] sm:$0xf]
        %v1184 = vld [vmem:[%s1169 + $0x38] sm:$0xf]
        %v1185 = vld [vmem:[%s1169 + $0x3c] sm:$0xf]
        %v1186 = vpack.c.bf16 %v1154, %v1153
        %v1187 = vpack.c.bf16 %v1156, %v1155
        %v1188 = vpack.c.bf16 %v1158, %v1157
        %v1189 = vpack.c.bf16 %v1160, %v1159
        %v1190 = vpack.c.bf16 %v1162, %v1161
        %v1191 = vpack.c.bf16 %v1164, %v1163
        %v1192 = vpack.c.bf16 %v1166, %v1165
        %v1193 = vpack.c.bf16 %v1168, %v1167
        %v1194 = vlaneseq
        %v1195 = vshrl.u32 %v1194, 7
        %v1196 = vsub.s32 5, %v1195
        %v1197 = vrot.slane %v235, %v1196
        %v1214 = vunpack.c.l.b16 %v1170
        %v1215 = vunpack.c.l.b16 %v1171
        %v1216 = vunpack.c.l.b16 %v1172
        %v1217 = vunpack.c.l.b16 %v1173
        %v1218 = vunpack.c.l.b16 %v1174
        %v1219 = vunpack.c.l.b16 %v1175
        %v1220 = vunpack.c.l.b16 %v1176
        %v1221 = vunpack.c.l.b16 %v1177
        %v1222 = vunpack.c.l.b16 %v1178
        %v1223 = vunpack.c.l.b16 %v1179
        %v1224 = vunpack.c.l.b16 %v1180
        %v1225 = vunpack.c.l.b16 %v1181
        %v1226 = vunpack.c.l.b16 %v1182
        %v1227 = vunpack.c.l.b16 %v1183
        %v1228 = vunpack.c.l.b16 %v1184
        %v1229 = vunpack.c.l.b16 %v1185
        %v1230 = vpack.c.b16 %v1215, %v1214
        %v1231 = vpack.c.b16 %v1217, %v1216
        %v1232 = vpack.c.b16 %v1219, %v1218
        %v1233 = vpack.c.b16 %v1221, %v1220
        %v1234 = vpack.c.b16 %v1223, %v1222
        %v1235 = vpack.c.b16 %v1225, %v1224
        %v1236 = vpack.c.b16 %v1227, %v1226
        %v1237 = vpack.c.b16 %v1229, %v1228
        %1246 = vmatprep.subr.bf16.mxu0 0
        %1247 = vmatpush1.bf16.msra.mxu0 %v1230
        %1248 = vmatprep.subr.bf16.mxu0 0
        %1249 = vmatpush1.bf16.msra.mxu0 %v1231
        %1250 = vmatprep.subr.bf16.mxu0 0
        %1251 = vmatpush1.bf16.msra.mxu0 %v1232
        %1252 = vmatprep.subr.bf16.mxu0 0
        %1253 = vmatpush1.bf16.msra.mxu0 %v1233
        %1254 = vmatprep.subr.bf16.mxu0 0
        %1255 = vmatpush1.bf16.msra.mxu0 %v1234
        %1256 = vmatprep.subr.bf16.mxu0 0
        %1257 = vmatpush1.bf16.msra.mxu0 %v1235
        %1258 = vmatprep.subr.bf16.mxu0 0
        %1259 = vmatpush1.bf16.msra.mxu0 %v1236
        %1260 = vmatprep.subr.bf16.mxu0 0
        %1261 = vmatpush1.bf16.msra.mxu0 %v1237
        %1262 = vmatprep.subr.bf16.mxu0 0
        %1263 = vmatpush1.bf16.msra.mxu0 0
        %1264 = vmatprep.subr.bf16.mxu0 0
        %1265 = vmatpush1.bf16.msra.mxu0 0
        %1266 = vmatprep.subr.bf16.mxu0 0
        %1267 = vmatpush1.bf16.msra.mxu0 0
        %1268 = vmatprep.subr.bf16.mxu0 0
        %1269 = vmatpush1.bf16.msra.mxu0 0
        %1270 = vmatprep.subr.bf16.mxu0 0
        %1271 = vmatpush1.bf16.msra.mxu0 0
        %1272 = vmatprep.subr.bf16.mxu0 0
        %1273 = vmatpush1.bf16.msra.mxu0 0
        %1274 = vmatprep.subr.bf16.mxu0 0
        %1275 = vmatpush1.bf16.msra.mxu0 0
        %1276 = vmatprep.subr.bf16.mxu0 0
        %1277 = vmatpush1.bf16.msra.mxu0 0
        %1278 = vmatprep.mubr.bf16.mxu0 0
        %1279 = vmatmul.mubr.bf16.gmra.mrb[0].mxu0 %v1186
        %v1280 = vpop.f32.mrb[0].mxu0
        %v1281 = vadd.f32 %v1197, %v1280
        %v1282 = vpop.f32.mrb[0].mxu0
        %v1283 = vpop.f32.mrb[0].mxu0
        %v1284 = vadd.f32 %v1197, %v1283
        %v1285 = vpop.f32.mrb[0].mxu0
        %1286 = vmatprep.mubr.bf16.mxu0 0
        %1287 = vmatmul.mubr.bf16.gmra.mrb[0].mxu0 %v1187
        %v1288 = vpop.f32.mrb[0].mxu0
        %v1289 = vadd.f32 %v1197, %v1288
        %v1290 = vpop.f32.mrb[0].mxu0
        %v1291 = vpop.f32.mrb[0].mxu0
        %v1292 = vadd.f32 %v1197, %v1291
        %v1293 = vpop.f32.mrb[0].mxu0
        %1294 = vmatprep.mubr.bf16.mxu0 0
        %1295 = vmatmul.mubr.bf16.gmra.mrb[0].mxu0 %v1188
        %v1296 = vpop.f32.mrb[0].mxu0
        %v1297 = vadd.f32 %v1197, %v1296
        %v1298 = vpop.f32.mrb[0].mxu0
        %v1299 = vpop.f32.mrb[0].mxu0
        %v1300 = vadd.f32 %v1197, %v1299
        %v1301 = vpop.f32.mrb[0].mxu0
        %1302 = vmatprep.mubr.bf16.mxu0 0
        %1303 = vmatmul.mubr.bf16.gmra.mrb[0].mxu0 %v1189
        %v1304 = vpop.f32.mrb[0].mxu0
        %v1305 = vadd.f32 %v1197, %v1304
        %v1306 = vpop.f32.mrb[0].mxu0
        %v1307 = vpop.f32.mrb[0].mxu0
        %v1308 = vadd.f32 %v1197, %v1307
        %v1309 = vpop.f32.mrb[0].mxu0
        %1310 = vmatprep.mubr.bf16.mxu0 0
        %1311 = vmatmul.mubr.bf16.gmra.mrb[0].mxu0 %v1190
        %v1312 = vpop.f32.mrb[0].mxu0
        %v1313 = vadd.f32 %v1197, %v1312
        %v1314 = vpop.f32.mrb[0].mxu0
        %v1315 = vpop.f32.mrb[0].mxu0
        %v1316 = vadd.f32 %v1197, %v1315
        %v1317 = vpop.f32.mrb[0].mxu0
        %1318 = vmatprep.mubr.bf16.mxu0 0
        %1319 = vmatmul.mubr.bf16.gmra.mrb[0].mxu0 %v1191
        %v1320 = vpop.f32.mrb[0].mxu0
        %v1321 = vadd.f32 %v1197, %v1320
        %v1322 = vpop.f32.mrb[0].mxu0
        %v1323 = vpop.f32.mrb[0].mxu0
        %v1324 = vadd.f32 %v1197, %v1323
        %v1325 = vpop.f32.mrb[0].mxu0
        %1326 = vmatprep.mubr.bf16.mxu0 0
        %1327 = vmatmul.mubr.bf16.gmra.mrb[0].mxu0 %v1192
        %v1328 = vpop.f32.mrb[0].mxu0
        %v1329 = vadd.f32 %v1197, %v1328
        %v1330 = vpop.f32.mrb[0].mxu0
        %v1331 = vpop.f32.mrb[0].mxu0
        %v1332 = vadd.f32 %v1197, %v1331
        %v1333 = vpop.f32.mrb[0].mxu0
        %1334 = vmatprep.mubr.bf16.mxu0 0
        %1335 = vmatmul.mubr.bf16.gmra.mrb[0].mxu0 %v1193
        %v1336 = vpop.f32.mrb[0].mxu0
        %v1337 = vadd.f32 %v1197, %v1336
        %v1338 = vpop.f32.mrb[0].mxu0
        %v1339 = vpop.f32.mrb[0].mxu0
        %v1340 = vadd.f32 %v1197, %v1339
        %v1341 = vpop.f32.mrb[0].mxu0
        %1342 = vdwg.mxu0
        %v1343 = vmax.f32 %v1281, 0.0
        %v1344 = vmax.f32 %v1284, 0.0
        %v1345 = vmax.f32 %v1289, 0.0
        %v1346 = vmax.f32 %v1292, 0.0
        %v1347 = vmax.f32 %v1297, 0.0
        %v1348 = vmax.f32 %v1300, 0.0
        %v1349 = vmax.f32 %v1305, 0.0
        %v1350 = vmax.f32 %v1308, 0.0
        %v1351 = vmax.f32 %v1313, 0.0
        %v1352 = vmax.f32 %v1316, 0.0
        %v1353 = vmax.f32 %v1321, 0.0
        %v1354 = vmax.f32 %v1324, 0.0
        %v1355 = vmax.f32 %v1329, 0.0
        %v1356 = vmax.f32 %v1332, 0.0
        %v1357 = vmax.f32 %v1337, 0.0
        %v1358 = vmax.f32 %v1340, 0.0
        %s1359 = scalar_lea.vmem [#allocation5], 384
        %v1360 = vld [vmem:[%s1359] sm:$0xf]
        %v1361 = vld [vmem:[%s1359 + $0x4] sm:$0xf]
        %v1362 = vld [vmem:[%s1359 + $0x8] sm:$0xf]
        %v1363 = vld [vmem:[%s1359 + $0xc] sm:$0xf]
        %v1364 = vld [vmem:[%s1359 + $0x10] sm:$0xf]
        %v1365 = vld [vmem:[%s1359 + $0x14] sm:$0xf]
        %v1366 = vld [vmem:[%s1359 + $0x18] sm:$0xf]
        %v1367 = vld [vmem:[%s1359 + $0x1c] sm:$0xf]
        %v1368 = vld [vmem:[%s1359 + $0x20] sm:$0xf]
        %v1369 = vld [vmem:[%s1359 + $0x24] sm:$0xf]
        %v1370 = vld [vmem:[%s1359 + $0x28] sm:$0xf]
        %v1371 = vld [vmem:[%s1359 + $0x2c] sm:$0xf]
        %v1372 = vld [vmem:[%s1359 + $0x30] sm:$0xf]
        %v1373 = vld [vmem:[%s1359 + $0x34] sm:$0xf]
        %v1374 = vld [vmem:[%s1359 + $0x38] sm:$0xf]
        %v1375 = vld [vmem:[%s1359 + $0x3c] sm:$0xf]
        %v1376 = vpack.c.bf16 %v1344, %v1343
        %v1377 = vpack.c.bf16 %v1346, %v1345
        %v1378 = vpack.c.bf16 %v1348, %v1347
        %v1379 = vpack.c.bf16 %v1350, %v1349
        %v1380 = vpack.c.bf16 %v1352, %v1351
        %v1381 = vpack.c.bf16 %v1354, %v1353
        %v1382 = vpack.c.bf16 %v1356, %v1355
        %v1383 = vpack.c.bf16 %v1358, %v1357
        %v1384 = vlaneseq
        %v1385 = vshrl.u32 %v1384, 7
        %v1386 = vsub.s32 6, %v1385
        %v1387 = vrot.slane %v235, %v1386
        %v1404 = vunpack.c.l.b16 %v1360
        %v1405 = vunpack.c.l.b16 %v1361
        %v1406 = vunpack.c.l.b16 %v1362
        %v1407 = vunpack.c.l.b16 %v1363
        %v1408 = vunpack.c.l.b16 %v1364
        %v1409 = vunpack.c.l.b16 %v1365
        %v1410 = vunpack.c.l.b16 %v1366
        %v1411 = vunpack.c.l.b16 %v1367
        %v1412 = vunpack.c.l.b16 %v1368
        %v1413 = vunpack.c.l.b16 %v1369
        %v1414 = vunpack.c.l.b16 %v1370
        %v1415 = vunpack.c.l.b16 %v1371
        %v1416 = vunpack.c.l.b16 %v1372
        %v1417 = vunpack.c.l.b16 %v1373
        %v1418 = vunpack.c.l.b16 %v1374
        %v1419 = vunpack.c.l.b16 %v1375
        %v1420 = vpack.c.b16 %v1405, %v1404
        %v1421 = vpack.c.b16 %v1407, %v1406
        %v1422 = vpack.c.b16 %v1409, %v1408
        %v1423 = vpack.c.b16 %v1411, %v1410
        %v1424 = vpack.c.b16 %v1413, %v1412
        %v1425 = vpack.c.b16 %v1415, %v1414
        %v1426 = vpack.c.b16 %v1417, %v1416
        %v1427 = vpack.c.b16 %v1419, %v1418
        %1436 = vmatprep.subr.bf16.mxu0 0
        %1437 = vmatpush1.bf16.msra.mxu0 %v1420
        %1438 = vmatprep.subr.bf16.mxu0 0
        %1439 = vmatpush1.bf16.msra.mxu0 %v1421
        %1440 = vmatprep.subr.bf16.mxu0 0
        %1441 = vmatpush1.bf16.msra.mxu0 %v1422
        %1442 = vmatprep.subr.bf16.mxu0 0
        %1443 = vmatpush1.bf16.msra.mxu0 %v1423
        %1444 = vmatprep.subr.bf16.mxu0 0
        %1445 = vmatpush1.bf16.msra.mxu0 %v1424
        %1446 = vmatprep.subr.bf16.mxu0 0
        %1447 = vmatpush1.bf16.msra.mxu0 %v1425
        %1448 = vmatprep.subr.bf16.mxu0 0
        %1449 = vmatpush1.bf16.msra.mxu0 %v1426
        %1450 = vmatprep.subr.bf16.mxu0 0
        %1451 = vmatpush1.bf16.msra.mxu0 %v1427
        %1452 = vmatprep.subr.bf16.mxu0 0
        %1453 = vmatpush1.bf16.msra.mxu0 0
        %1454 = vmatprep.subr.bf16.mxu0 0
        %1455 = vmatpush1.bf16.msra.mxu0 0
        %1456 = vmatprep.subr.bf16.mxu0 0
        %1457 = vmatpush1.bf16.msra.mxu0 0
        %1458 = vmatprep.subr.bf16.mxu0 0
        %1459 = vmatpush1.bf16.msra.mxu0 0
        %1460 = vmatprep.subr.bf16.mxu0 0
        %1461 = vmatpush1.bf16.msra.mxu0 0
        %1462 = vmatprep.subr.bf16.mxu0 0
        %1463 = vmatpush1.bf16.msra.mxu0 0
        %1464 = vmatprep.subr.bf16.mxu0 0
        %1465 = vmatpush1.bf16.msra.mxu0 0
        %1466 = vmatprep.subr.bf16.mxu0 0
        %1467 = vmatpush1.bf16.msra.mxu0 0
        %1468 = vmatprep.mubr.bf16.mxu0 0
        %1469 = vmatmul.mubr.bf16.gmra.mrb[0].mxu0 %v1376
        %v1470 = vpop.f32.mrb[0].mxu0
        %v1471 = vadd.f32 %v1387, %v1470
        %v1472 = vpop.f32.mrb[0].mxu0
        %v1473 = vpop.f32.mrb[0].mxu0
        %v1474 = vadd.f32 %v1387, %v1473
        %v1475 = vpop.f32.mrb[0].mxu0
        %1476 = vmatprep.mubr.bf16.mxu0 0
        %1477 = vmatmul.mubr.bf16.gmra.mrb[0].mxu0 %v1377
        %v1478 = vpop.f32.mrb[0].mxu0
        %v1479 = vadd.f32 %v1387, %v1478
        %v1480 = vpop.f32.mrb[0].mxu0
        %v1481 = vpop.f32.mrb[0].mxu0
        %v1482 = vadd.f32 %v1387, %v1481
        %v1483 = vpop.f32.mrb[0].mxu0
        %1484 = vmatprep.mubr.bf16.mxu0 0
        %1485 = vmatmul.mubr.bf16.gmra.mrb[0].mxu0 %v1378
        %v1486 = vpop.f32.mrb[0].mxu0
        %v1487 = vadd.f32 %v1387, %v1486
        %v1488 = vpop.f32.mrb[0].mxu0
        %v1489 = vpop.f32.mrb[0].mxu0
        %v1490 = vadd.f32 %v1387, %v1489
        %v1491 = vpop.f32.mrb[0].mxu0
        %1492 = vmatprep.mubr.bf16.mxu0 0
        %1493 = vmatmul.mubr.bf16.gmra.mrb[0].mxu0 %v1379
        %v1494 = vpop.f32.mrb[0].mxu0
        %v1495 = vadd.f32 %v1387, %v1494
        %v1496 = vpop.f32.mrb[0].mxu0
        %v1497 = vpop.f32.mrb[0].mxu0
        %v1498 = vadd.f32 %v1387, %v1497
        %v1499 = vpop.f32.mrb[0].mxu0
        %1500 = vmatprep.mubr.bf16.mxu0 0
        %1501 = vmatmul.mubr.bf16.gmra.mrb[0].mxu0 %v1380
        %v1502 = vpop.f32.mrb[0].mxu0
        %v1503 = vadd.f32 %v1387, %v1502
        %v1504 = vpop.f32.mrb[0].mxu0
        %v1505 = vpop.f32.mrb[0].mxu0
        %v1506 = vadd.f32 %v1387, %v1505
        %v1507 = vpop.f32.mrb[0].mxu0
        %1508 = vmatprep.mubr.bf16.mxu0 0
        %1509 = vmatmul.mubr.bf16.gmra.mrb[0].mxu0 %v1381
        %v1510 = vpop.f32.mrb[0].mxu0
        %v1511 = vadd.f32 %v1387, %v1510
        %v1512 = vpop.f32.mrb[0].mxu0
        %v1513 = vpop.f32.mrb[0].mxu0
        %v1514 = vadd.f32 %v1387, %v1513
        %v1515 = vpop.f32.mrb[0].mxu0
        %1516 = vmatprep.mubr.bf16.mxu0 0
        %1517 = vmatmul.mubr.bf16.gmra.mrb[0].mxu0 %v1382
        %v1518 = vpop.f32.mrb[0].mxu0
        %v1519 = vadd.f32 %v1387, %v1518
        %v1520 = vpop.f32.mrb[0].mxu0
        %v1521 = vpop.f32.mrb[0].mxu0
        %v1522 = vadd.f32 %v1387, %v1521
        %v1523 = vpop.f32.mrb[0].mxu0
        %1524 = vmatprep.mubr.bf16.mxu0 0
        %1525 = vmatmul.mubr.bf16.gmra.mrb[0].mxu0 %v1383
        %v1526 = vpop.f32.mrb[0].mxu0
        %v1527 = vadd.f32 %v1387, %v1526
        %v1528 = vpop.f32.mrb[0].mxu0
        %v1529 = vpop.f32.mrb[0].mxu0
        %v1530 = vadd.f32 %v1387, %v1529
        %v1531 = vpop.f32.mrb[0].mxu0
        %1532 = vdwg.mxu0
        %v1533 = vmax.f32 %v1471, 0.0
        %v1534 = vmax.f32 %v1474, 0.0
        %v1535 = vmax.f32 %v1479, 0.0
        %v1536 = vmax.f32 %v1482, 0.0
        %v1537 = vmax.f32 %v1487, 0.0
        %v1538 = vmax.f32 %v1490, 0.0
        %v1539 = vmax.f32 %v1495, 0.0
        %v1540 = vmax.f32 %v1498, 0.0
        %v1541 = vmax.f32 %v1503, 0.0
        %v1542 = vmax.f32 %v1506, 0.0
        %v1543 = vmax.f32 %v1511, 0.0
        %v1544 = vmax.f32 %v1514, 0.0
        %v1545 = vmax.f32 %v1519, 0.0
        %v1546 = vmax.f32 %v1522, 0.0
        %v1547 = vmax.f32 %v1527, 0.0
        %v1548 = vmax.f32 %v1530, 0.0
        %s1549 = scalar_lea.vmem [#allocation5], 448
        %v1550 = vld [vmem:[%s1549] sm:$0xf]
        %v1551 = vld [vmem:[%s1549 + $0x4] sm:$0xf]
        %v1552 = vld [vmem:[%s1549 + $0x8] sm:$0xf]
        %v1553 = vld [vmem:[%s1549 + $0xc] sm:$0xf]
        %v1554 = vld [vmem:[%s1549 + $0x10] sm:$0xf]
        %v1555 = vld [vmem:[%s1549 + $0x14] sm:$0xf]
        %v1556 = vld [vmem:[%s1549 + $0x18] sm:$0xf]
        %v1557 = vld [vmem:[%s1549 + $0x1c] sm:$0xf]
        %v1558 = vld [vmem:[%s1549 + $0x20] sm:$0xf]
        %v1559 = vld [vmem:[%s1549 + $0x24] sm:$0xf]
        %v1560 = vld [vmem:[%s1549 + $0x28] sm:$0xf]
        %v1561 = vld [vmem:[%s1549 + $0x2c] sm:$0xf]
        %v1562 = vld [vmem:[%s1549 + $0x30] sm:$0xf]
        %v1563 = vld [vmem:[%s1549 + $0x34] sm:$0xf]
        %v1564 = vld [vmem:[%s1549 + $0x38] sm:$0xf]
        %v1565 = vld [vmem:[%s1549 + $0x3c] sm:$0xf]
        %v1566 = vpack.c.bf16 %v1534, %v1533
        %v1567 = vpack.c.bf16 %v1536, %v1535
        %v1568 = vpack.c.bf16 %v1538, %v1537
        %v1569 = vpack.c.bf16 %v1540, %v1539
        %v1570 = vpack.c.bf16 %v1542, %v1541
        %v1571 = vpack.c.bf16 %v1544, %v1543
        %v1572 = vpack.c.bf16 %v1546, %v1545
        %v1573 = vpack.c.bf16 %v1548, %v1547
        %v1574 = vlaneseq
        %v1575 = vshrl.u32 %v1574, 7
        %v1576 = vsub.s32 7, %v1575
        %v1577 = vrot.slane %v235, %v1576
        %v1594 = vunpack.c.l.b16 %v1550
        %v1595 = vunpack.c.l.b16 %v1551
        %v1596 = vunpack.c.l.b16 %v1552
        %v1597 = vunpack.c.l.b16 %v1553
        %v1598 = vunpack.c.l.b16 %v1554
        %v1599 = vunpack.c.l.b16 %v1555
        %v1600 = vunpack.c.l.b16 %v1556
        %v1601 = vunpack.c.l.b16 %v1557
        %v1602 = vunpack.c.l.b16 %v1558
        %v1603 = vunpack.c.l.b16 %v1559
        %v1604 = vunpack.c.l.b16 %v1560
        %v1605 = vunpack.c.l.b16 %v1561
        %v1606 = vunpack.c.l.b16 %v1562
        %v1607 = vunpack.c.l.b16 %v1563
        %v1608 = vunpack.c.l.b16 %v1564
        %v1609 = vunpack.c.l.b16 %v1565
        %v1610 = vpack.c.b16 %v1595, %v1594
        %v1611 = vpack.c.b16 %v1597, %v1596
        %v1612 = vpack.c.b16 %v1599, %v1598
        %v1613 = vpack.c.b16 %v1601, %v1600
        %v1614 = vpack.c.b16 %v1603, %v1602
        %v1615 = vpack.c.b16 %v1605, %v1604
        %v1616 = vpack.c.b16 %v1607, %v1606
        %v1617 = vpack.c.b16 %v1609, %v1608
        %1626 = vmatprep.subr.bf16.mxu0 0
        %1627 = vmatpush1.bf16.msra.mxu0 %v1610
        %1628 = vmatprep.subr.bf16.mxu0 0
        %1629 = vmatpush1.bf16.msra.mxu0 %v1611
        %1630 = vmatprep.subr.bf16.mxu0 0
        %1631 = vmatpush1.bf16.msra.mxu0 %v1612
        %1632 = vmatprep.subr.bf16.mxu0 0
        %1633 = vmatpush1.bf16.msra.mxu0 %v1613
        %1634 = vmatprep.subr.bf16.mxu0 0
        %1635 = vmatpush1.bf16.msra.mxu0 %v1614
        %1636 = vmatprep.subr.bf16.mxu0 0
        %1637 = vmatpush1.bf16.msra.mxu0 %v1615
        %1638 = vmatprep.subr.bf16.mxu0 0
        %1639 = vmatpush1.bf16.msra.mxu0 %v1616
        %1640 = vmatprep.subr.bf16.mxu0 0
        %1641 = vmatpush1.bf16.msra.mxu0 %v1617
        %1642 = vmatprep.subr.bf16.mxu0 0
        %1643 = vmatpush1.bf16.msra.mxu0 0
        %1644 = vmatprep.subr.bf16.mxu0 0
        %1645 = vmatpush1.bf16.msra.mxu0 0
        %1646 = vmatprep.subr.bf16.mxu0 0
        %1647 = vmatpush1.bf16.msra.mxu0 0
        %1648 = vmatprep.subr.bf16.mxu0 0
        %1649 = vmatpush1.bf16.msra.mxu0 0
        %1650 = vmatprep.subr.bf16.mxu0 0
        %1651 = vmatpush1.bf16.msra.mxu0 0
        %1652 = vmatprep.subr.bf16.mxu0 0
        %1653 = vmatpush1.bf16.msra.mxu0 0
        %1654 = vmatprep.subr.bf16.mxu0 0
        %1655 = vmatpush1.bf16.msra.mxu0 0
        %1656 = vmatprep.subr.bf16.mxu0 0
        %1657 = vmatpush1.bf16.msra.mxu0 0
        %1658 = vmatprep.mubr.bf16.mxu0 0
        %1659 = vmatmul.mubr.bf16.gmra.mrb[0].mxu0 %v1566
        %v1660 = vpop.f32.mrb[0].mxu0
        %v1661 = vadd.f32 %v1577, %v1660
        %v1662 = vpop.f32.mrb[0].mxu0
        %v1663 = vpop.f32.mrb[0].mxu0
        %v1664 = vadd.f32 %v1577, %v1663
        %v1665 = vpop.f32.mrb[0].mxu0
        %1666 = vmatprep.mubr.bf16.mxu0 0
        %1667 = vmatmul.mubr.bf16.gmra.mrb[0].mxu0 %v1567
        %v1668 = vpop.f32.mrb[0].mxu0
        %v1669 = vadd.f32 %v1577, %v1668
        %v1670 = vpop.f32.mrb[0].mxu0
        %v1671 = vpop.f32.mrb[0].mxu0
        %v1672 = vadd.f32 %v1577, %v1671
        %v1673 = vpop.f32.mrb[0].mxu0
        %1674 = vmatprep.mubr.bf16.mxu0 0
        %1675 = vmatmul.mubr.bf16.gmra.mrb[0].mxu0 %v1568
        %v1676 = vpop.f32.mrb[0].mxu0
        %v1677 = vadd.f32 %v1577, %v1676
        %v1678 = vpop.f32.mrb[0].mxu0
        %v1679 = vpop.f32.mrb[0].mxu0
        %v1680 = vadd.f32 %v1577, %v1679
        %v1681 = vpop.f32.mrb[0].mxu0
        %1682 = vmatprep.mubr.bf16.mxu0 0
        %1683 = vmatmul.mubr.bf16.gmra.mrb[0].mxu0 %v1569
        %v1684 = vpop.f32.mrb[0].mxu0
        %v1685 = vadd.f32 %v1577, %v1684
        %v1686 = vpop.f32.mrb[0].mxu0
        %v1687 = vpop.f32.mrb[0].mxu0
        %v1688 = vadd.f32 %v1577, %v1687
        %v1689 = vpop.f32.mrb[0].mxu0
        %1690 = vmatprep.mubr.bf16.mxu0 0
        %1691 = vmatmul.mubr.bf16.gmra.mrb[0].mxu0 %v1570
        %v1692 = vpop.f32.mrb[0].mxu0
        %v1693 = vadd.f32 %v1577, %v1692
        %v1694 = vpop.f32.mrb[0].mxu0
        %v1695 = vpop.f32.mrb[0].mxu0
        %v1696 = vadd.f32 %v1577, %v1695
        %v1697 = vpop.f32.mrb[0].mxu0
        %1698 = vmatprep.mubr.bf16.mxu0 0
        %1699 = vmatmul.mubr.bf16.gmra.mrb[0].mxu0 %v1571
        %v1700 = vpop.f32.mrb[0].mxu0
        %v1701 = vadd.f32 %v1577, %v1700
        %v1702 = vpop.f32.mrb[0].mxu0
        %v1703 = vpop.f32.mrb[0].mxu0
        %v1704 = vadd.f32 %v1577, %v1703
        %v1705 = vpop.f32.mrb[0].mxu0
        %1706 = vmatprep.mubr.bf16.mxu0 0
        %1707 = vmatmul.mubr.bf16.gmra.mrb[0].mxu0 %v1572
        %v1708 = vpop.f32.mrb[0].mxu0
        %v1709 = vadd.f32 %v1577, %v1708
        %v1710 = vpop.f32.mrb[0].mxu0
        %v1711 = vpop.f32.mrb[0].mxu0
        %v1712 = vadd.f32 %v1577, %v1711
        %v1713 = vpop.f32.mrb[0].mxu0
        %1714 = vmatprep.mubr.bf16.mxu0 0
        %1715 = vmatmul.mubr.bf16.gmra.mrb[0].mxu0 %v1573
        %v1716 = vpop.f32.mrb[0].mxu0
        %v1717 = vadd.f32 %v1577, %v1716
        %v1718 = vpop.f32.mrb[0].mxu0
        %v1719 = vpop.f32.mrb[0].mxu0
        %v1720 = vadd.f32 %v1577, %v1719
        %v1721 = vpop.f32.mrb[0].mxu0
        %1722 = vdwg.mxu0
        %1723 = vst [vmem:[%s215] sm:$0xff] %v1661
        %1724 = vst [vmem:[%s215 + $0x8] sm:$0xff] %v1664
        %1725 = vst [vmem:[%s215 + $0x10] sm:$0xff] %v1669
        %1726 = vst [vmem:[%s215 + $0x18] sm:$0xff] %v1672
        %1727 = vst [vmem:[%s215 + $0x20] sm:$0xff] %v1677
        %1728 = vst [vmem:[%s215 + $0x28] sm:$0xff] %v1680
        %1729 = vst [vmem:[%s215 + $0x30] sm:$0xff] %v1685
        %1730 = vst [vmem:[%s215 + $0x38] sm:$0xff] %v1688
        %1731 = vst [vmem:[%s215 + $0x40] sm:$0xff] %v1693
        %1732 = vst [vmem:[%s215 + $0x48] sm:$0xff] %v1696
        %1733 = vst [vmem:[%s215 + $0x50] sm:$0xff] %v1701
        %1734 = vst [vmem:[%s215 + $0x58] sm:$0xff] %v1704
        %1735 = vst [vmem:[%s215 + $0x60] sm:$0xff] %v1709
        %1736 = vst [vmem:[%s215 + $0x68] sm:$0xff] %v1712
        %1737 = vst [vmem:[%s215 + $0x70] sm:$0xff] %v1717
        %1738 = vst [vmem:[%s215 + $0x78] sm:$0xff] %v1720
        %s1739 = sand.u32 %s97, 1
        %s1740 = scalar_lea.sflag [#allocation4], %s1739
        %s1741 = sand.u32 %s97, 1
        %s1742 = smul.addr %s1741, 128
        %s1743 = scalar_lea.vmem [#allocation8], %s1742
        // Predicated region
        $region45: #{tpu_custom_call.1} parent=31 // pred_check
          %p1744 = pneg %p107
        $region46: #{tpu_custom_call.1} parent=31 // pred_check_branch
          %1746 = sbr.rel (%p1744) target = $region48
        $region47: #{tpu_custom_call.1} parent=31 // pred_region
          %s1747 = smul.u32 16, %s21
          %s1749 = ssub.s32 2048, 2048
          %1750 = vsyncadd %s1740, %s1749
          %s1751 = smul.addr %s1747, 128
          %s1752 = scalar_lea.hbm %s3, %s1751
          %s1753 = sshll.u32 %s1743, 4
          %s1754 = int_to_ptr.vmem [resolvable:$true] %s1753
          %1759 = dma.vmem_to_hbm [thread:$0]  %s1754, 2048, %s1752, %s1740, 128, 128, 8
        $region48: #{tpu_custom_call.1} parent=31 // pred_fallthru
          _
      $region32: #{tpu_custom_call.1} parent=5 // pred_fallthru
        _
      %p1760 = scmp.le.s32.totalorder 2, %s16
      // Predicated region
      $region49: #{tpu_custom_call.1} parent=5 // pred_check
        %p1761 = pneg %p1760
      $region50: #{tpu_custom_call.1} parent=5 // pred_check_branch
        %1763 = sbr.rel (%p1761) target = $region52
      $region51: #{tpu_custom_call.1} parent=5 // pred_region
        %s1764 = ssub.s32 %s16, 2
        // Predicated region
        $region53: #{tpu_custom_call.1} parent=51 // pred_check
          %p1765 = pneg %p113
        $region54: #{tpu_custom_call.1} parent=51 // pred_check_branch
          %1767 = sbr.rel (%p1765) target = $region56
        $region55: #{tpu_custom_call.1} parent=51 // pred_region
          %s1768 = sand.u32 %s98, 1
          %s1769 = scalar_lea.sflag [#allocation4], %s1768
          %s1770 = sand.u32 %s98, 1
          %s1771 = smul.addr %s1770, 128
          %s1772 = scalar_lea.vmem [#allocation8], %s1771
          %1773 = dma.done %s1769, 2048
        $region56: #{tpu_custom_call.1} parent=51 // pred_fallthru
          _
      $region52: #{tpu_custom_call.1} parent=5 // pred_fallthru
        _
    $region6: #{tpu_custom_call.1} parent=1 // loop_footer
      %s20 = sadd.s32 1, %s16
    $region7: #{tpu_custom_call.1} parent=1 // loop_footer_branch
      %15 = sbr.rel target = $region3
    $region8: #{tpu_custom_call.1} parent=1 // loop_exit
      _
    %1774 = vsyncpa [#allocation3], 1
    %s1775 = scalar_lea.sflag [#allocation3], 1
    %1776 = vsyncpa %s1775, 1
    %1777 = vsyncpa [#allocation6], 1
    %1778 = vsyncpa [#allocation4], 1
    %s1779 = scalar_lea.sflag [#allocation4], 1
    %1780 = vsyncpa %s1779, 1

</llo_original>
